<compile_context>
chip_gen: v7x
topology: tpu7x:2x2x1
jax: 0.10.0
libtpu: 0.0.40
codegen_flags: <defaults>
</compile_context>

<pallas_src>
import functools
import numpy as np
import jax
import jax.numpy as jnp
from jax.experimental import pallas as pl
from jax.experimental.pallas import tpu as pltpu

_LANE = 128
_SUBLANE = 8


def _round_up(x, m):
    return -(-x // m) * m


def _round_down(x, m):
    return (x // m) * m


def _cdiv(a, b):
    return -(-a // b)


def _tpu_vmem_capacity_bytes():
    try:
        info = pltpu.get_tpu_info()
        v = getattr(info, "vmem_capacity_bytes", None)
        if v:
            return int(v)
    except Exception:
        pass
    return 64 << 20  # conservative (v7x-sized) fallback


def _tpu_num_tensorcores():
    """Best-effort TensorCore-per-chip detection (gates the v7x batch split)."""
    try:
        info = pltpu.get_tpu_info()
        for attr in ("num_cores", "num_tensorcores", "tensorcores_per_chip",
                     "num_cores_per_chip", "core_count"):
            v = getattr(info, attr, None)
            if v:
                return int(v)
    except Exception:
        pass
    try:
        if "v7" in jax.devices()[0].device_kind.lower():
            return 2
    except Exception:
        pass
    return 1


def _mlp_kernel(s_ref, g_ref, w1s_ref, w1g_ref, b1_ref, w2_ref, b2_ref,
                w3_ref, b3_ref, o_ref, *, reduce_out):
    """Fused concat + 3-layer MLP on one batch tile.

    Layer 1's concat is fused by splitting W1 into its state / goal row blocks.
    Inputs arrive f32 and are cast to bf16 in-kernel; all matmuls accumulate in f32.
    """
    s = s_ref[...].astype(jnp.bfloat16)
    g = g_ref[...].astype(jnp.bfloat16)
    h = (jnp.dot(s, w1s_ref[...], preferred_element_type=jnp.float32)
         + jnp.dot(g, w1g_ref[...], preferred_element_type=jnp.float32)
         + b1_ref[...])
    h = jnp.maximum(h, 0.0).astype(jnp.bfloat16)               # ReLU, back to bf16
    h = jnp.dot(h, w2_ref[...], preferred_element_type=jnp.float32) + b2_ref[...]
    h = jnp.maximum(h, 0.0)                                     # keep f32 for layer 3
    if reduce_out:
        # dim_out == 1: VPU multiply + XLU lane reduction instead of an MXU matmul
        # whose columns would be 127/128 zeros.  Broadcast across the lane-dense
        # 128-wide output block; only column 0 carries the bias / is kept.
        o = jnp.sum(h * w3_ref[...], axis=-1, keepdims=True)    # (tb, 1)
        o_ref[...] = (jnp.broadcast_to(o, o_ref.shape) + b3_ref[...]).astype(o_ref.dtype)
    else:
        o = jnp.dot(h.astype(jnp.bfloat16), w3_ref[...],
                    preferred_element_type=jnp.float32) + b3_ref[...]
        o_ref[...] = o.astype(o_ref.dtype)


class StateGoalNetworkPallas:
    """JAX/Pallas port of StateGoalNetwork with default embeddings (Flatten)."""

    def __init__(self, obs_shape, goal_shape, dim_out=1, layers=(512, 512),
                 seed=0, param_dtype=jnp.bfloat16):
        assert len(layers) == 2, "kernel is specialized for the default 2 hidden layers"
        self.state_dim = int(np.prod(obs_shape))
        self.goal_dim = int(np.prod(goal_shape))
        self.dim_in = self.state_dim + self.goal_dim
        self.dim_out = int(dim_out)
        self.h1, self.h2 = int(layers[0]), int(layers[1])
        self.param_dtype = param_dtype
        self.out_pad = _round_up(self.dim_out, _LANE)
        # Lane-dense K for layer 1: pad feature dims to multiples of 128 (zero rows
        # in W1_state / W1_goal keep the math identical).  No-op for aligned dims.
        self.sdim_pad = _round_up(self.state_dim, _LANE)
        self.gdim_pad = _round_up(self.goal_dim, _LANE)
        self.reduce_out = (self.dim_out == 1)

        # Deterministic PyTorch-Linear-style init: U(-1/sqrt(fan_in), 1/sqrt(fan_in)).
        # Master copies kept in f32 (reference / training); kernel weights in bf16.
        key = jax.random.PRNGKey(seed)
        dims = [self.dim_in, self.h1, self.h2, self.dim_out]
        self.master_params = []
        for i in range(3):
            fan_in, fan_out = dims[i], dims[i + 1]
            key, kw, kb = jax.random.split(key, 3)
            bound = 1.0 / np.sqrt(fan_in)
            # stored as (in, out) == torch weight (out, in) transposed
            w = jax.random.uniform(kw, (fan_in, fan_out), jnp.float32, -bound, bound)
            b = jax.random.uniform(kb, (1, fan_out), jnp.float32, -bound, bound)
            self.master_params += [w, b]

        w1, b1, w2, b2, w3, b3 = self.master_params
        # Split W1 rows (state | goal) so the concat can be fused inside the kernel;
        # zero-pad the row counts to the lane-aligned feature widths.
        w1s = jnp.zeros((self.sdim_pad, self.h1), jnp.float32)
        w1s = w1s.at[: self.state_dim].set(w1[: self.state_dim])
        w1g = jnp.zeros((self.gdim_pad, self.h1), jnp.float32)
        w1g = w1g.at[: self.goal_dim].set(w1[self.state_dim:])
        # Layer 3: (1, h2) f32 row for the VPU/XLU reduce path, otherwise a
        # zero-padded lane-dense (h2, out_pad) bf16 matmul weight.
        if self.reduce_out:
            w3k = w3.reshape(1, self.h2).astype(jnp.float32)
        else:
            w3k = (jnp.zeros((self.h2, self.out_pad), jnp.float32)
                   .at[:, : self.dim_out].set(w3).astype(param_dtype))
        b3k = jnp.zeros((1, self.out_pad), jnp.float32).at[:, : self.dim_out].set(b3)
        # Biases stay f32 (tiny); big weights in bf16 for MXU rate + half the DMA/VMEM.
        self.kernel_params = [
            w1s.astype(param_dtype), w1g.astype(param_dtype), b1,
            w2.astype(param_dtype), b2,
            w3k, b3k,
        ]

    # ----- tiling / VMEM heuristics --------------------------------------------

    def _est_vmem_bytes(self, tb):
        f32, bf16 = 4, 2
        # Once-fetched weights/biases (Pallas still allocates two pipeline buffers).
        w = (self.sdim_pad * self.h1 + self.gdim_pad * self.h1
             + self.h1 * self.h2) * bf16
        w += (self.h1 + self.h2 + self.out_pad) * f32
        w += (self.h2 * f32) if self.reduce_out else (self.h2 * self.out_pad * bf16)
        w *= 2
        # Double-buffered streaming f32 activation tiles + f32 output tile.
        act = 2 * tb * (self.sdim_pad + self.gdim_pad) * f32
        out = 2 * tb * self.out_pad * f32
        # f32 layer-1/2 intermediates + bf16 recasts kept live inside the body.
        inter = tb * (2 * self.h1 * f32 + 2 * self.h2 * f32
                      + (self.h1 + self.h2) * bf16)
        return w + act + out + inter

    def _pick_tb(self, b_run, budget, ncores):
        max_tb = 1024          # 512-1024 rows amortize the ~0.35us per-step overhead
        tb = min(max_tb, max(_SUBLANE, _round_down(b_run, _SUBLANE)))
        if tb >= 16:
            tb = _round_down(tb, 16)            # bf16 sublane packing of the hidden cast
        while tb > 16 and self._est_vmem_bytes(tb) > budget:
            tb = max(16, _round_down(tb // 2, 16))
        # Multi-TensorCore chips (v7x): ensure the batch grid has >= ncores steps so
        # dimension_semantics=("parallel",) actually shards the batch.
        if ncores > 1 and b_run >= 16 * ncores:
            tb = min(tb, _round_up(_cdiv(b_run, ncores), 16))
        return tb

    # ----- forward ---------------------------------------------------------------

    def __call__(self, state, goal):
        B = state.shape[0]
        # Flatten() == row-major reshape (metadata only); NO wrapper-side dtype cast —
        # the bf16 cast happens inside the kernel (hidden under MXU work).
        s = state.reshape(B, -1)
        g = goal.reshape(B, -1)
        if self.sdim_pad != self.state_dim:
            s = jnp.pad(s, ((0, 0), (0, self.sdim_pad - self.state_dim)))
        if self.gdim_pad != self.goal_dim:
            g = jnp.pad(g, ((0, 0), (0, self.gdim_pad - self.goal_dim)))
        # Only tiny batches get padded (to a single 8-row sublane); ragged last tiles
        # for larger B rely on Pallas boundary clipping — garbage padded rows only feed
        # output rows that are sliced off below.
        b_run = B
        if B < _SUBLANE:
            b_run = _SUBLANE
            s = jnp.pad(s, ((0, b_run - B), (0, 0)))
            g = jnp.pad(g, ((0, b_run - B), (0, 0)))

        vmem_cap = _tpu_vmem_capacity_bytes()
        # Generation-aware scoped-VMEM limit: ~48 MiB of 64 on v7x, ~96 MiB of 128 on
        # v5e/v6e (always leave >= 16 MiB headroom for internal scratch).
        vmem_limit = max(32 << 20,
                         int(min(vmem_cap * 3 // 4, vmem_cap - (16 << 20))))
        ncores = _tpu_num_tensorcores()
        tb = self._pick_tb(b_run, budget=int(0.4 * vmem_limit), ncores=ncores)
        grid = (_cdiv(b_run, tb),)

        sdim, gdim = self.sdim_pad, self.gdim_pad
        h1, h2, npad = self.h1, self.h2, self.out_pad
        w3_shape = (1, h2) if self.reduce_out else (h2, npad)

        in_specs = [
            # streaming activation tiles (batch grid)
            pl.BlockSpec((tb, sdim), lambda i: (i, 0)),
            pl.BlockSpec((tb, gdim), lambda i: (i, 0)),
            # resident weights / biases (constant index_map -> fetched once)
            pl.BlockSpec((sdim, h1), lambda i: (0, 0)),
            pl.BlockSpec((gdim, h1), lambda i: (0, 0)),
            pl.BlockSpec((1, h1), lambda i: (0, 0)),
            pl.BlockSpec((h1, h2), lambda i: (0, 0)),
            pl.BlockSpec((1, h2), lambda i: (0, 0)),
            pl.BlockSpec(w3_shape, lambda i: (0, 0)),
            pl.BlockSpec((1, npad), lambda i: (0, 0)),
        ]
        out_spec = pl.BlockSpec((tb, npad), lambda i: (i, 0))

        # Advisory cost estimate so XLA schedules neighbors around the custom call.
        in_itemsize = jnp.dtype(s.dtype).itemsize
        w_bytes = sum(int(np.prod(p.shape)) * jnp.dtype(p.dtype).itemsize
                      for p in self.kernel_params)
        l3_flops = 2 * h2 * (1 if self.reduce_out else npad)
        flops = int(b_run * (2 * (sdim + gdim) * h1 + 2 * h1 * h2 + l3_flops))
        bytes_accessed = int(b_run * (sdim + gdim) * in_itemsize + w_bytes
                             + b_run * npad * 4)
        ce = pl.CostEstimate(flops=flops, transcendentals=0,
                             bytes_accessed=bytes_accessed)

        kernel = functools.partial(_mlp_kernel, reduce_out=self.reduce_out)
        out = pl.pallas_call(
            kernel,
            out_shape=jax.ShapeDtypeStruct((b_run, npad), jnp.float32),
            grid=grid,
            in_specs=in_specs,
            out_specs=out_spec,
            compiler_params=pltpu.CompilerParams(
                dimension_semantics=("parallel",),      # megacore batch split on v7x
                vmem_limit_bytes=vmem_limit),
            cost_estimate=ce,
        )(s, g, *self.kernel_params)

        return out[:B, : self.dim_out]


def _reference(net, state, goal):
    """Pure-JAX f32 reference (same math as the PyTorch module)."""
    B = state.shape[0]
    x = jnp.concatenate(
        [state.reshape(B, -1), goal.reshape(B, -1)], axis=1
    ).astype(jnp.float32)
    w1, b1, w2, b2, w3, b3 = net.master_params
    h = jnp.maximum(x @ w1 + b1, 0.0)
    h = jnp.maximum(h @ w2 + b2, 0.0)
    return h @ w3 + b3


if __name__ == "__main__":
    # Small deterministic inputs: batch=2, obs/goal space = (4, 8, 8) (NCHW)
    B = 2
    obs_shape = (4, 8, 8)     # -> 256 flat features
    goal_shape = (4, 8, 8)    # -> 256 flat features, dim_in = 512

    key = jax.random.PRNGKey(0)
    ks, kg = jax.random.split(key)
    state = jax.random.normal(ks, (B,) + obs_shape, dtype=jnp.float32)
    goal = jax.random.normal(kg, (B,) + goal_shape, dtype=jnp.float32)

    net = StateGoalNetworkPallas(obs_shape, goal_shape, dim_out=1,
                                 layers=(512, 512), seed=0)

    out = net(state, goal)
    out = jax.block_until_ready(out)
    assert out.shape == (B, 1)

    ref = _reference(net, state, goal)
    # bf16 weights/activations with f32 accumulation vs. f32 reference.
    np.testing.assert_allclose(np.asarray(out), np.asarray(ref), rtol=2e-2, atol=2e-2)

    print("KERNEL_OK")
</pallas_src>

<mosaic_0001>
module attributes {stable_mosaic.version = 11 : i64} {
  func.func @_mlp_kernel(%arg0: i32, %arg1: memref<8x256xf32, #tpu.memory_space<vmem>>, %arg2: memref<8x256xf32, #tpu.memory_space<vmem>>, %arg3: memref<256x512xbf16, #tpu.memory_space<vmem>>, %arg4: memref<256x512xbf16, #tpu.memory_space<vmem>>, %arg5: memref<1x512xf32, #tpu.memory_space<vmem>>, %arg6: memref<512x512xbf16, #tpu.memory_space<vmem>>, %arg7: memref<1x512xf32, #tpu.memory_space<vmem>>, %arg8: memref<1x512xf32, #tpu.memory_space<vmem>>, %arg9: memref<1x128xf32, #tpu.memory_space<vmem>>, %arg10: memref<8x128xf32, #tpu.memory_space<vmem>>) attributes {dimension_semantics = [#tpu.dimension_semantics<parallel>], iteration_bounds = array<i64: 1>, scalar_prefetch = 0 : i64, scratch_operands = 0 : i64, tpu.core_type = #tpu.core_type<tc>, window_params = [{transform_indices = @transform_0, window_bounds = array<i64: 8, 256>}, {transform_indices = @transform_1, window_bounds = array<i64: 8, 256>}, {pipeline_mode = #tpu.pipeline_mode<synchronous>, transform_indices = @transform_2, window_bounds = array<i64: 256, 512>}, {pipeline_mode = #tpu.pipeline_mode<synchronous>, transform_indices = @transform_3, window_bounds = array<i64: 256, 512>}, {pipeline_mode = #tpu.pipeline_mode<synchronous>, transform_indices = @transform_4, window_bounds = array<i64: 1, 512>}, {pipeline_mode = #tpu.pipeline_mode<synchronous>, transform_indices = @transform_5, window_bounds = array<i64: 512, 512>}, {pipeline_mode = #tpu.pipeline_mode<synchronous>, transform_indices = @transform_6, window_bounds = array<i64: 1, 512>}, {pipeline_mode = #tpu.pipeline_mode<synchronous>, transform_indices = @transform_7, window_bounds = array<i64: 1, 512>}, {pipeline_mode = #tpu.pipeline_mode<synchronous>, transform_indices = @transform_8, window_bounds = array<i64: 1, 128>}, {transform_indices = @transform_9, window_bounds = array<i64: 8, 128>}]} {
    %c0 = arith.constant 0 : index
    %c0_0 = arith.constant 0 : index
    %0 = vector.load %arg1[%c0, %c0_0] : memref<8x256xf32, #tpu.memory_space<vmem>>, vector<8x256xf32>
    %1 = arith.truncf %0 : vector<8x256xf32> to vector<8x256xbf16>
    %c0_1 = arith.constant 0 : index
    %c0_2 = arith.constant 0 : index
    %2 = vector.load %arg2[%c0_1, %c0_2] : memref<8x256xf32, #tpu.memory_space<vmem>>, vector<8x256xf32>
    %3 = arith.truncf %2 : vector<8x256xf32> to vector<8x256xbf16>
    %c0_3 = arith.constant 0 : index
    %c0_4 = arith.constant 0 : index
    %4 = vector.load %arg3[%c0_3, %c0_4] : memref<256x512xbf16, #tpu.memory_space<vmem>>, vector<256x512xbf16>
    %cst = arith.constant dense<0.000000e+00> : vector<8x512xf32>
    %5 = tpu.matmul %1, %4, %cst {dimension_numbers = #tpu.dot_dimension_numbers<[1], [0], [0], [1], [0, 0, 1, 1], [], []>} : vector<8x256xbf16>, vector<256x512xbf16>, vector<8x512xf32> -> vector<8x512xf32>
    %c0_5 = arith.constant 0 : index
    %c0_6 = arith.constant 0 : index
    %6 = vector.load %arg4[%c0_5, %c0_6] : memref<256x512xbf16, #tpu.memory_space<vmem>>, vector<256x512xbf16>
    %cst_7 = arith.constant dense<0.000000e+00> : vector<8x512xf32>
    %7 = tpu.matmul %3, %6, %cst_7 {dimension_numbers = #tpu.dot_dimension_numbers<[1], [0], [0], [1], [0, 0, 1, 1], [], []>} : vector<8x256xbf16>, vector<256x512xbf16>, vector<8x512xf32> -> vector<8x512xf32>
    %8 = arith.addf %5, %7 : vector<8x512xf32>
    %c0_8 = arith.constant 0 : index
    %c0_9 = arith.constant 0 : index
    %9 = vector.load %arg5[%c0_8, %c0_9] : memref<1x512xf32, #tpu.memory_space<vmem>>, vector<1x512xf32>
    %10 = vector.broadcast %9 : vector<1x512xf32> to vector<8x512xf32>
    %11 = arith.addf %8, %10 : vector<8x512xf32>
    %cst_10 = arith.constant 0.000000e+00 : f32
    %12 = vector.broadcast %cst_10 : f32 to vector<8x512xf32>
    %13 = arith.maximumf %11, %12 : vector<8x512xf32>
    %14 = arith.truncf %13 : vector<8x512xf32> to vector<8x512xbf16>
    %c0_11 = arith.constant 0 : index
    %c0_12 = arith.constant 0 : index
    %15 = vector.load %arg6[%c0_11, %c0_12] : memref<512x512xbf16, #tpu.memory_space<vmem>>, vector<512x512xbf16>
    %cst_13 = arith.constant dense<0.000000e+00> : vector<8x512xf32>
    %16 = tpu.matmul %14, %15, %cst_13 {dimension_numbers = #tpu.dot_dimension_numbers<[1], [0], [0], [1], [0, 0, 1, 1], [], []>} : vector<8x512xbf16>, vector<512x512xbf16>, vector<8x512xf32> -> vector<8x512xf32>
    %c0_14 = arith.constant 0 : index
    %c0_15 = arith.constant 0 : index
    %17 = vector.load %arg7[%c0_14, %c0_15] : memref<1x512xf32, #tpu.memory_space<vmem>>, vector<1x512xf32>
    %18 = vector.broadcast %17 : vector<1x512xf32> to vector<8x512xf32>
    %19 = arith.addf %16, %18 : vector<8x512xf32>
    %cst_16 = arith.constant 0.000000e+00 : f32
    %20 = vector.broadcast %cst_16 : f32 to vector<8x512xf32>
    %21 = arith.maximumf %19, %20 : vector<8x512xf32>
    %c0_17 = arith.constant 0 : index
    %c0_18 = arith.constant 0 : index
    %22 = vector.load %arg8[%c0_17, %c0_18] : memref<1x512xf32, #tpu.memory_space<vmem>>, vector<1x512xf32>
    %23 = vector.broadcast %22 : vector<1x512xf32> to vector<8x512xf32>
    %24 = arith.mulf %21, %23 : vector<8x512xf32>
    %cst_19 = arith.constant dense<0.000000e+00> : vector<8xf32>
    %25 = vector.multi_reduction <add>, %24, %cst_19 [1] : vector<8x512xf32> to vector<8xf32>
    %26 = vector.shape_cast %25 : vector<8xf32> to vector<8x1xf32>
    %27 = vector.shape_cast %26 : vector<8x1xf32> to vector<8x1xf32>
    %28 = vector.broadcast %27 : vector<8x1xf32> to vector<8x128xf32>
    %c0_20 = arith.constant 0 : index
    %c0_21 = arith.constant 0 : index
    %29 = vector.load %arg9[%c0_20, %c0_21] : memref<1x128xf32, #tpu.memory_space<vmem>>, vector<1x128xf32>
    %30 = vector.broadcast %29 : vector<1x128xf32> to vector<8x128xf32>
    %31 = arith.addf %28, %30 : vector<8x128xf32>
    %c0_22 = arith.constant 0 : index
    %c0_23 = arith.constant 0 : index
    %32 = vector.load %arg10[%c0_22, %c0_23] : memref<8x128xf32, #tpu.memory_space<vmem>>, vector<8x128xf32>
    tpu.vector_store %arg10[%c0_22, %c0_23], %31 {strides = array<i32>} : memref<8x128xf32, #tpu.memory_space<vmem>>, vector<8x128xf32>,
    return
  }
  func.func @transform_0(%arg0: i32) -> (i32, i32) {
    %c0_i32 = arith.constant 0 : i32
    %c0_i32_0 = arith.constant 0 : i32
    return %arg0, %c0_i32 : i32, i32
  }
  func.func @transform_1(%arg0: i32) -> (i32, i32) {
    %c0_i32 = arith.constant 0 : i32
    %c0_i32_0 = arith.constant 0 : i32
    return %arg0, %c0_i32 : i32, i32
  }
  func.func @transform_2(%arg0: i32) -> (i32, i32) {
    %c0_i32 = arith.constant 0 : i32
    %c0_i32_0 = arith.constant 0 : i32
    %c0_i32_1 = arith.constant 0 : i32
    return %c0_i32, %c0_i32_0 : i32, i32
  }
  func.func @transform_3(%arg0: i32) -> (i32, i32) {
    %c0_i32 = arith.constant 0 : i32
    %c0_i32_0 = arith.constant 0 : i32
    %c0_i32_1 = arith.constant 0 : i32
    return %c0_i32, %c0_i32_0 : i32, i32
  }
  func.func @transform_4(%arg0: i32) -> (i32, i32) {
    %c0_i32 = arith.constant 0 : i32
    %c0_i32_0 = arith.constant 0 : i32
    %c0_i32_1 = arith.constant 0 : i32
    return %c0_i32, %c0_i32_0 : i32, i32
  }
  func.func @transform_5(%arg0: i32) -> (i32, i32) {
    %c0_i32 = arith.constant 0 : i32
    %c0_i32_0 = arith.constant 0 : i32
    %c0_i32_1 = arith.constant 0 : i32
    return %c0_i32, %c0_i32_0 : i32, i32
  }
  func.func @transform_6(%arg0: i32) -> (i32, i32) {
    %c0_i32 = arith.constant 0 : i32
    %c0_i32_0 = arith.constant 0 : i32
    %c0_i32_1 = arith.constant 0 : i32
    return %c0_i32, %c0_i32_0 : i32, i32
  }
  func.func @transform_7(%arg0: i32) -> (i32, i32) {
    %c0_i32 = arith.constant 0 : i32
    %c0_i32_0 = arith.constant 0 : i32
    %c0_i32_1 = arith.constant 0 : i32
    return %c0_i32, %c0_i32_0 : i32, i32
  }
  func.func @transform_8(%arg0: i32) -> (i32, i32) {
    %c0_i32 = arith.constant 0 : i32
    %c0_i32_0 = arith.constant 0 : i32
    %c0_i32_1 = arith.constant 0 : i32
    return %c0_i32, %c0_i32_0 : i32, i32
  }
  func.func @transform_9(%arg0: i32) -> (i32, i32) {
    %c0_i32 = arith.constant 0 : i32
    %c0_i32_0 = arith.constant 0 : i32
    return %arg0, %c0_i32 : i32, i32
  }
}

</mosaic_0001>

<llo_original>
// kernel: tpu_custom_call.1
$region0: #{tpu_custom_call.1}
  #allocation0 [shape = 'u32[]', space=smem, size = 0x4, offset = 0x4, fixed_abs, tag = 'smem constant byte address 0x4 - core index']
  #allocation1 [shape = 'u32[144,128]{1,0:T(1,128)}', space=vmem, size = 0x12000, scoped, tag = 'internal scratch']
  %s0 = inlined_call_operand.hbm [shape: f32[8,256], index: 0, kind: input, shape index: {}]
  %s1 = inlined_call_operand.hbm [shape: f32[8,256], index: 1, kind: input, shape index: {}]
  %s2 = inlined_call_operand.hbm [shape: bf16[256,512], index: 2, kind: input, shape index: {}]
  %s3 = inlined_call_operand.hbm [shape: bf16[256,512], index: 3, kind: input, shape index: {}]
  %s4 = inlined_call_operand.vmem [shape: f32[1,512], index: 4, kind: input, shape index: {}]
  %s5 = inlined_call_operand.hbm [shape: bf16[512,512], index: 5, kind: input, shape index: {}]
  %s6 = inlined_call_operand.vmem [shape: f32[1,512], index: 6, kind: input, shape index: {}]
  %s7 = inlined_call_operand.vmem [shape: f32[1,512], index: 7, kind: input, shape index: {}]
  %s8 = inlined_call_operand.vmem [shape: f32[1,128], index: 8, kind: input, shape index: {}]
  %s9 = inlined_call_operand.hbm [shape: f32[8,128], index: 9, kind: output, shape index: {}]
  %s10 = sld [smem:[#allocation0]]
  $region66: #{tpu_custom_call.1} parent=0
    _
  %s12 = ssub.s32 1, %s10
  %s13 = scalar_select 0, %s12, %s10
  $region1: #{tpu_custom_call.1} parent=0
    #allocation2 [shape = 'u8[8192]{0}', space=vmem, size = 0x2000, scoped, tag = 'input window, operand 0, single buffered']
    #allocation3 [shape = 's32[1]{0}', space=sflag, size = 0x4, scoped, tag = 'scoped memory for tpu_custom_call.1']
    #allocation4 [shape = 's32[1]{0}', space=sflag, size = 0x4, scoped, tag = 'scoped memory for tpu_custom_call.1']
    #allocation5 [shape = 'u8[8192]{0}', space=vmem, size = 0x2000, scoped, tag = 'input window, operand 1, single buffered']
    #allocation6 [shape = 's32[1]{0}', space=sflag, size = 0x4, scoped, tag = 'scoped memory for tpu_custom_call.1']
    #allocation7 [shape = 'u8[262144]{0}', space=vmem, size = 0x40000, scoped, tag = 'input window, operand 2, single buffered']
    #allocation8 [shape = 'u8[262144]{0}', space=vmem, size = 0x40000, scoped, tag = 'input window, operand 3, single buffered']
    #allocation9 [shape = 's32[1]{0}', space=sflag, size = 0x4, scoped, tag = 'scoped memory for tpu_custom_call.1']
    #allocation10 [shape = 'u8[524288]{0}', space=vmem, size = 0x80000, scoped, tag = 'input window, operand 5, single buffered']
    #allocation11 [shape = 'u8[4096]{0}', space=vmem, size = 0x1000, scoped, tag = 'output window, operand 0, single buffered']
    %14 = vsyncpa [#allocation3], 0
    %15 = vsyncpa [#allocation6], 0
    %16 = vsyncpa [#allocation9], 0
    %17 = vsyncpa [#allocation4], 0
    // Predicated region
    $region2: #{tpu_custom_call.1} parent=1 // pred_check
      _
    $region3: #{tpu_custom_call.1} parent=1 // pred_check_branch
      %19 = sbr.rel (0) target = $region5
    $region4: #{tpu_custom_call.1} parent=1 // pred_region
      %s21 = ssub.s32 256, 256
      %22 = vsyncadd [#allocation3], %s21
      %s24 = sshll.u32 [#allocation2], 4
      %s25 = int_to_ptr.vmem [resolvable:$true] %s24
      %27 = dma.hbm_to_vmem [thread:$0]  %s0, 256, %s25, [#allocation3]
    $region5: #{tpu_custom_call.1} parent=1 // pred_fallthru
      _
    // Predicated region
    $region6: #{tpu_custom_call.1} parent=1 // pred_check
      _
    $region7: #{tpu_custom_call.1} parent=1 // pred_check_branch
      %29 = sbr.rel (0) target = $region9
    $region8: #{tpu_custom_call.1} parent=1 // pred_region
      %s31 = ssub.s32 256, 256
      %32 = vsyncadd [#allocation6], %s31
      %s34 = sshll.u32 [#allocation5], 4
      %s35 = int_to_ptr.vmem [resolvable:$true] %s34
      %37 = dma.hbm_to_vmem [thread:$0]  %s1, 256, %s35, [#allocation6]
    $region9: #{tpu_custom_call.1} parent=1 // pred_fallthru
      _
    // Predicated region
    $region10: #{tpu_custom_call.1} parent=1 // pred_check
      _
    $region11: #{tpu_custom_call.1} parent=1 // pred_check_branch
      %39 = sbr.rel (0) target = $region13
    $region12: #{tpu_custom_call.1} parent=1 // pred_region
      %s41 = ssub.s32 8192, 8192
      %42 = vsyncadd [#allocation6], %s41
      %s43 = sshll.u32 [#allocation7], 4
      %s44 = int_to_ptr.vmem [resolvable:$true] %s43
      %49 = dma.hbm_to_vmem [thread:$0]  %s2, 8192, %s44, [#allocation6], 256, 256, 16
    $region13: #{tpu_custom_call.1} parent=1 // pred_fallthru
      _
    // Predicated region
    $region14: #{tpu_custom_call.1} parent=1 // pred_check
      _
    $region15: #{tpu_custom_call.1} parent=1 // pred_check_branch
      %51 = sbr.rel (0) target = $region17
    $region16: #{tpu_custom_call.1} parent=1 // pred_region
      %s53 = ssub.s32 8192, 8192
      %54 = vsyncadd [#allocation9], %s53
      %s55 = sshll.u32 [#allocation8], 4
      %s56 = int_to_ptr.vmem [resolvable:$true] %s55
      %61 = dma.hbm_to_vmem [thread:$0]  %s3, 8192, %s56, [#allocation9], 256, 256, 16
    $region17: #{tpu_custom_call.1} parent=1 // pred_fallthru
      _
    // Predicated region
    $region18: #{tpu_custom_call.1} parent=1 // pred_check
      _
    $region19: #{tpu_custom_call.1} parent=1 // pred_check_branch
      %63 = sbr.rel (0) target = $region21
    $region20: #{tpu_custom_call.1} parent=1 // pred_region
      _
    $region21: #{tpu_custom_call.1} parent=1 // pred_fallthru
      _
    // Predicated region
    $region22: #{tpu_custom_call.1} parent=1 // pred_check
      _
    $region23: #{tpu_custom_call.1} parent=1 // pred_check_branch
      %65 = sbr.rel (0) target = $region25
    $region24: #{tpu_custom_call.1} parent=1 // pred_region
      %s67 = ssub.s32 16384, 16384
      %68 = vsyncadd [#allocation9], %s67
      %s69 = sshll.u32 [#allocation10], 4
      %s70 = int_to_ptr.vmem [resolvable:$true] %s69
      %75 = dma.hbm_to_vmem [thread:$0]  %s5, 16384, %s70, [#allocation9], 256, 256, 16
    $region25: #{tpu_custom_call.1} parent=1 // pred_fallthru
      _
    // Predicated region
    $region26: #{tpu_custom_call.1} parent=1 // pred_check
      _
    $region27: #{tpu_custom_call.1} parent=1 // pred_check_branch
      %77 = sbr.rel (0) target = $region29
    $region28: #{tpu_custom_call.1} parent=1 // pred_region
      _
    $region29: #{tpu_custom_call.1} parent=1 // pred_fallthru
      _
    // Predicated region
    $region30: #{tpu_custom_call.1} parent=1 // pred_check
      _
    $region31: #{tpu_custom_call.1} parent=1 // pred_check_branch
      %79 = sbr.rel (0) target = $region33
    $region32: #{tpu_custom_call.1} parent=1 // pred_region
      _
    $region33: #{tpu_custom_call.1} parent=1 // pred_fallthru
      _
    // Predicated region
    $region34: #{tpu_custom_call.1} parent=1 // pred_check
      _
    $region35: #{tpu_custom_call.1} parent=1 // pred_check_branch
      %81 = sbr.rel (0) target = $region37
    $region36: #{tpu_custom_call.1} parent=1 // pred_region
      _
    $region37: #{tpu_custom_call.1} parent=1 // pred_fallthru
      _
    // Predicated region
    $region38: #{tpu_custom_call.1} parent=1 // pred_check
      _
    $region39: #{tpu_custom_call.1} parent=1 // pred_check_branch
      %83 = sbr.rel (0) target = $region41
    $region40: #{tpu_custom_call.1} parent=1 // pred_region
      %84 = dma.done [#allocation3], 256
    $region41: #{tpu_custom_call.1} parent=1 // pred_fallthru
      _
    // Predicated region
    $region42: #{tpu_custom_call.1} parent=1 // pred_check
      _
    $region43: #{tpu_custom_call.1} parent=1 // pred_check_branch
      %86 = sbr.rel (0) target = $region45
    $region44: #{tpu_custom_call.1} parent=1 // pred_region
      %87 = dma.done [#allocation6], 256
    $region45: #{tpu_custom_call.1} parent=1 // pred_fallthru
      _
    // Predicated region
    $region46: #{tpu_custom_call.1} parent=1 // pred_check
      _
    $region47: #{tpu_custom_call.1} parent=1 // pred_check_branch
      %89 = sbr.rel (0) target = $region49
    $region48: #{tpu_custom_call.1} parent=1 // pred_region
      %90 = dma.done [#allocation6], 8192
    $region49: #{tpu_custom_call.1} parent=1 // pred_fallthru
      _
    // Predicated region
    $region50: #{tpu_custom_call.1} parent=1 // pred_check
      _
    $region51: #{tpu_custom_call.1} parent=1 // pred_check_branch
      %92 = sbr.rel (0) target = $region53
    $region52: #{tpu_custom_call.1} parent=1 // pred_region
      %93 = dma.done [#allocation9], 8192
    $region53: #{tpu_custom_call.1} parent=1 // pred_fallthru
      _
    // Predicated region
    $region54: #{tpu_custom_call.1} parent=1 // pred_check
      _
    $region55: #{tpu_custom_call.1} parent=1 // pred_check_branch
      %95 = sbr.rel (0) target = $region57
    $region56: #{tpu_custom_call.1} parent=1 // pred_region
      %96 = dma.done [#allocation9], 16384
    $region57: #{tpu_custom_call.1} parent=1 // pred_fallthru
      _
    %v97 = vld [vmem:[#allocation2] sm:$0xff]
    %v98 = vld [vmem:[#allocation2 + $0x8] sm:$0xff]
    %v99 = vpack.c.bf16 %v97, %v97
    %v100 = vpack.c.bf16 %v98, %v98
    %v101 = vld [vmem:[#allocation5] sm:$0xff]
    %v102 = vld [vmem:[#allocation5 + $0x8] sm:$0xff]
    %v103 = vpack.c.bf16 %v101, %v101
    %v104 = vpack.c.bf16 %v102, %v102
    %v105 = vld [vmem:[#allocation7] sm:$0xff]
    %v106 = vld [vmem:[#allocation7 + $0x8] sm:$0xff]
    %v107 = vld [vmem:[#allocation7 + $0x10] sm:$0xff]
    %v108 = vld [vmem:[#allocation7 + $0x18] sm:$0xff]
    %v109 = vld [vmem:[#allocation7 + $0x20] sm:$0xff]
    %v110 = vld [vmem:[#allocation7 + $0x28] sm:$0xff]
    %v111 = vld [vmem:[#allocation7 + $0x30] sm:$0xff]
    %v112 = vld [vmem:[#allocation7 + $0x38] sm:$0xff]
    %v113 = vld [vmem:[#allocation7 + $0x40] sm:$0xff]
    %v114 = vld [vmem:[#allocation7 + $0x48] sm:$0xff]
    %v115 = vld [vmem:[#allocation7 + $0x50] sm:$0xff]
    %v116 = vld [vmem:[#allocation7 + $0x58] sm:$0xff]
    %v117 = vld [vmem:[#allocation7 + $0x60] sm:$0xff]
    %v118 = vld [vmem:[#allocation7 + $0x68] sm:$0xff]
    %v119 = vld [vmem:[#allocation7 + $0x70] sm:$0xff]
    %v120 = vld [vmem:[#allocation7 + $0x78] sm:$0xff]
    %v121 = vld [vmem:[#allocation7 + $0x80] sm:$0xff]
    %v122 = vld [vmem:[#allocation7 + $0x88] sm:$0xff]
    %v123 = vld [vmem:[#allocation7 + $0x90] sm:$0xff]
    %v124 = vld [vmem:[#allocation7 + $0x98] sm:$0xff]
    %v125 = vld [vmem:[#allocation7 + $0xa0] sm:$0xff]
    %v126 = vld [vmem:[#allocation7 + $0xa8] sm:$0xff]
    %v127 = vld [vmem:[#allocation7 + $0xb0] sm:$0xff]
    %v128 = vld [vmem:[#allocation7 + $0xb8] sm:$0xff]
    %v129 = vld [vmem:[#allocation7 + $0xc0] sm:$0xff]
    %v130 = vld [vmem:[#allocation7 + $0xc8] sm:$0xff]
    %v131 = vld [vmem:[#allocation7 + $0xd0] sm:$0xff]
    %v132 = vld [vmem:[#allocation7 + $0xd8] sm:$0xff]
    %v133 = vld [vmem:[#allocation7 + $0xe0] sm:$0xff]
    %v134 = vld [vmem:[#allocation7 + $0xe8] sm:$0xff]
    %v135 = vld [vmem:[#allocation7 + $0xf0] sm:$0xff]
    %v136 = vld [vmem:[#allocation7 + $0xf8] sm:$0xff]
    %v137 = vld [vmem:[#allocation7 + $0x100] sm:$0xff]
    %v138 = vld [vmem:[#allocation7 + $0x108] sm:$0xff]
    %v139 = vld [vmem:[#allocation7 + $0x110] sm:$0xff]
    %v140 = vld [vmem:[#allocation7 + $0x118] sm:$0xff]
    %v141 = vld [vmem:[#allocation7 + $0x120] sm:$0xff]
    %v142 = vld [vmem:[#allocation7 + $0x128] sm:$0xff]
    %v143 = vld [vmem:[#allocation7 + $0x130] sm:$0xff]
    %v144 = vld [vmem:[#allocation7 + $0x138] sm:$0xff]
    %v145 = vld [vmem:[#allocation7 + $0x140] sm:$0xff]
    %v146 = vld [vmem:[#allocation7 + $0x148] sm:$0xff]
    %v147 = vld [vmem:[#allocation7 + $0x150] sm:$0xff]
    %v148 = vld [vmem:[#allocation7 + $0x158] sm:$0xff]
    %v149 = vld [vmem:[#allocation7 + $0x160] sm:$0xff]
    %v150 = vld [vmem:[#allocation7 + $0x168] sm:$0xff]
    %v151 = vld [vmem:[#allocation7 + $0x170] sm:$0xff]
    %v152 = vld [vmem:[#allocation7 + $0x178] sm:$0xff]
    %v153 = vld [vmem:[#allocation7 + $0x180] sm:$0xff]
    %v154 = vld [vmem:[#allocation7 + $0x188] sm:$0xff]
    %v155 = vld [vmem:[#allocation7 + $0x190] sm:$0xff]
    %v156 = vld [vmem:[#allocation7 + $0x198] sm:$0xff]
    %v157 = vld [vmem:[#allocation7 + $0x1a0] sm:$0xff]
    %v158 = vld [vmem:[#allocation7 + $0x1a8] sm:$0xff]
    %v159 = vld [vmem:[#allocation7 + $0x1b0] sm:$0xff]
    %v160 = vld [vmem:[#allocation7 + $0x1b8] sm:$0xff]
    %v161 = vld [vmem:[#allocation7 + $0x1c0] sm:$0xff]
    %v162 = vld [vmem:[#allocation7 + $0x1c8] sm:$0xff]
    %v163 = vld [vmem:[#allocation7 + $0x1d0] sm:$0xff]
    %v164 = vld [vmem:[#allocation7 + $0x1d8] sm:$0xff]
    %v165 = vld [vmem:[#allocation7 + $0x1e0] sm:$0xff]
    %v166 = vld [vmem:[#allocation7 + $0x1e8] sm:$0xff]
    %v167 = vld [vmem:[#allocation7 + $0x1f0] sm:$0xff]
    %v168 = vld [vmem:[#allocation7 + $0x1f8] sm:$0xff]
    %v169 = vld [vmem:[#allocation8] sm:$0xff]
    %v170 = vld [vmem:[#allocation8 + $0x8] sm:$0xff]
    %v171 = vld [vmem:[#allocation8 + $0x10] sm:$0xff]
    %v172 = vld [vmem:[#allocation8 + $0x18] sm:$0xff]
    %v173 = vld [vmem:[#allocation8 + $0x20] sm:$0xff]
    %v174 = vld [vmem:[#allocation8 + $0x28] sm:$0xff]
    %v175 = vld [vmem:[#allocation8 + $0x30] sm:$0xff]
    %v176 = vld [vmem:[#allocation8 + $0x38] sm:$0xff]
    %v177 = vld [vmem:[#allocation8 + $0x40] sm:$0xff]
    %v178 = vld [vmem:[#allocation8 + $0x48] sm:$0xff]
    %v179 = vld [vmem:[#allocation8 + $0x50] sm:$0xff]
    %v180 = vld [vmem:[#allocation8 + $0x58] sm:$0xff]
    %v181 = vld [vmem:[#allocation8 + $0x60] sm:$0xff]
    %v182 = vld [vmem:[#allocation8 + $0x68] sm:$0xff]
    %v183 = vld [vmem:[#allocation8 + $0x70] sm:$0xff]
    %v184 = vld [vmem:[#allocation8 + $0x78] sm:$0xff]
    %v185 = vld [vmem:[#allocation8 + $0x80] sm:$0xff]
    %v186 = vld [vmem:[#allocation8 + $0x88] sm:$0xff]
    %v187 = vld [vmem:[#allocation8 + $0x90] sm:$0xff]
    %v188 = vld [vmem:[#allocation8 + $0x98] sm:$0xff]
    %v189 = vld [vmem:[#allocation8 + $0xa0] sm:$0xff]
    %v190 = vld [vmem:[#allocation8 + $0xa8] sm:$0xff]
    %v191 = vld [vmem:[#allocation8 + $0xb0] sm:$0xff]
    %v192 = vld [vmem:[#allocation8 + $0xb8] sm:$0xff]
    %v193 = vld [vmem:[#allocation8 + $0xc0] sm:$0xff]
    %v194 = vld [vmem:[#allocation8 + $0xc8] sm:$0xff]
    %v195 = vld [vmem:[#allocation8 + $0xd0] sm:$0xff]
    %v196 = vld [vmem:[#allocation8 + $0xd8] sm:$0xff]
    %v197 = vld [vmem:[#allocation8 + $0xe0] sm:$0xff]
    %v198 = vld [vmem:[#allocation8 + $0xe8] sm:$0xff]
    %v199 = vld [vmem:[#allocation8 + $0xf0] sm:$0xff]
    %v200 = vld [vmem:[#allocation8 + $0xf8] sm:$0xff]
    %v201 = vld [vmem:[#allocation8 + $0x100] sm:$0xff]
    %v202 = vld [vmem:[#allocation8 + $0x108] sm:$0xff]
    %v203 = vld [vmem:[#allocation8 + $0x110] sm:$0xff]
    %v204 = vld [vmem:[#allocation8 + $0x118] sm:$0xff]
    %v205 = vld [vmem:[#allocation8 + $0x120] sm:$0xff]
    %v206 = vld [vmem:[#allocation8 + $0x128] sm:$0xff]
    %v207 = vld [vmem:[#allocation8 + $0x130] sm:$0xff]
    %v208 = vld [vmem:[#allocation8 + $0x138] sm:$0xff]
    %v209 = vld [vmem:[#allocation8 + $0x140] sm:$0xff]
    %v210 = vld [vmem:[#allocation8 + $0x148] sm:$0xff]
    %v211 = vld [vmem:[#allocation8 + $0x150] sm:$0xff]
    %v212 = vld [vmem:[#allocation8 + $0x158] sm:$0xff]
    %v213 = vld [vmem:[#allocation8 + $0x160] sm:$0xff]
    %v214 = vld [vmem:[#allocation8 + $0x168] sm:$0xff]
    %v215 = vld [vmem:[#allocation8 + $0x170] sm:$0xff]
    %v216 = vld [vmem:[#allocation8 + $0x178] sm:$0xff]
    %v217 = vld [vmem:[#allocation8 + $0x180] sm:$0xff]
    %v218 = vld [vmem:[#allocation8 + $0x188] sm:$0xff]
    %v219 = vld [vmem:[#allocation8 + $0x190] sm:$0xff]
    %v220 = vld [vmem:[#allocation8 + $0x198] sm:$0xff]
    %v221 = vld [vmem:[#allocation8 + $0x1a0] sm:$0xff]
    %v222 = vld [vmem:[#allocation8 + $0x1a8] sm:$0xff]
    %v223 = vld [vmem:[#allocation8 + $0x1b0] sm:$0xff]
    %v224 = vld [vmem:[#allocation8 + $0x1b8] sm:$0xff]
    %v225 = vld [vmem:[#allocation8 + $0x1c0] sm:$0xff]
    %v226 = vld [vmem:[#allocation8 + $0x1c8] sm:$0xff]
    %v227 = vld [vmem:[#allocation8 + $0x1d0] sm:$0xff]
    %v228 = vld [vmem:[#allocation8 + $0x1d8] sm:$0xff]
    %v229 = vld [vmem:[#allocation8 + $0x1e0] sm:$0xff]
    %v230 = vld [vmem:[#allocation8 + $0x1e8] sm:$0xff]
    %v231 = vld [vmem:[#allocation8 + $0x1f0] sm:$0xff]
    %v232 = vld [vmem:[#allocation8 + $0x1f8] sm:$0xff]
    %v297 = vunpack.c.l.b16 %v169
    %v298 = vunpack.c.h.b16 %v169
    %v299 = vunpack.c.l.b16 %v170
    %v300 = vunpack.c.h.b16 %v170
    %v301 = vunpack.c.l.b16 %v171
    %v302 = vunpack.c.h.b16 %v171
    %v303 = vunpack.c.l.b16 %v172
    %v304 = vunpack.c.h.b16 %v172
    %v305 = vunpack.c.l.b16 %v173
    %v306 = vunpack.c.h.b16 %v173
    %v307 = vunpack.c.l.b16 %v174
    %v308 = vunpack.c.h.b16 %v174
    %v309 = vunpack.c.l.b16 %v175
    %v310 = vunpack.c.h.b16 %v175
    %v311 = vunpack.c.l.b16 %v176
    %v312 = vunpack.c.h.b16 %v176
    %v313 = vunpack.c.l.b16 %v177
    %v314 = vunpack.c.h.b16 %v177
    %v315 = vunpack.c.l.b16 %v178
    %v316 = vunpack.c.h.b16 %v178
    %v317 = vunpack.c.l.b16 %v179
    %v318 = vunpack.c.h.b16 %v179
    %v319 = vunpack.c.l.b16 %v180
    %v320 = vunpack.c.h.b16 %v180
    %v321 = vunpack.c.l.b16 %v181
    %v322 = vunpack.c.h.b16 %v181
    %v323 = vunpack.c.l.b16 %v182
    %v324 = vunpack.c.h.b16 %v182
    %v325 = vunpack.c.l.b16 %v183
    %v326 = vunpack.c.h.b16 %v183
    %v327 = vunpack.c.l.b16 %v184
    %v328 = vunpack.c.h.b16 %v184
    %v329 = vunpack.c.l.b16 %v185
    %v330 = vunpack.c.h.b16 %v185
    %v331 = vunpack.c.l.b16 %v186
    %v332 = vunpack.c.h.b16 %v186
    %v333 = vunpack.c.l.b16 %v187
    %v334 = vunpack.c.h.b16 %v187
    %v335 = vunpack.c.l.b16 %v188
    %v336 = vunpack.c.h.b16 %v188
    %v337 = vunpack.c.l.b16 %v189
    %v338 = vunpack.c.h.b16 %v189
    %v339 = vunpack.c.l.b16 %v190
    %v340 = vunpack.c.h.b16 %v190
    %v341 = vunpack.c.l.b16 %v191
    %v342 = vunpack.c.h.b16 %v191
    %v343 = vunpack.c.l.b16 %v192
    %v344 = vunpack.c.h.b16 %v192
    %v345 = vunpack.c.l.b16 %v193
    %v346 = vunpack.c.h.b16 %v193
    %v347 = vunpack.c.l.b16 %v194
    %v348 = vunpack.c.h.b16 %v194
    %v349 = vunpack.c.l.b16 %v195
    %v350 = vunpack.c.h.b16 %v195
    %v351 = vunpack.c.l.b16 %v196
    %v352 = vunpack.c.h.b16 %v196
    %v353 = vunpack.c.l.b16 %v197
    %v354 = vunpack.c.h.b16 %v197
    %v355 = vunpack.c.l.b16 %v198
    %v356 = vunpack.c.h.b16 %v198
    %v357 = vunpack.c.l.b16 %v199
    %v358 = vunpack.c.h.b16 %v199
    %v359 = vunpack.c.l.b16 %v200
    %v360 = vunpack.c.h.b16 %v200
    %v361 = vunpack.c.l.b16 %v201
    %v362 = vunpack.c.h.b16 %v201
    %v363 = vunpack.c.l.b16 %v202
    %v364 = vunpack.c.h.b16 %v202
    %v365 = vunpack.c.l.b16 %v203
    %v366 = vunpack.c.h.b16 %v203
    %v367 = vunpack.c.l.b16 %v204
    %v368 = vunpack.c.h.b16 %v204
    %v369 = vunpack.c.l.b16 %v205
    %v370 = vunpack.c.h.b16 %v205
    %v371 = vunpack.c.l.b16 %v206
    %v372 = vunpack.c.h.b16 %v206
    %v373 = vunpack.c.l.b16 %v207
    %v374 = vunpack.c.h.b16 %v207
    %v375 = vunpack.c.l.b16 %v208
    %v376 = vunpack.c.h.b16 %v208
    %v377 = vunpack.c.l.b16 %v209
    %v378 = vunpack.c.h.b16 %v209
    %v379 = vunpack.c.l.b16 %v210
    %v380 = vunpack.c.h.b16 %v210
    %v381 = vunpack.c.l.b16 %v211
    %v382 = vunpack.c.h.b16 %v211
    %v383 = vunpack.c.l.b16 %v212
    %v384 = vunpack.c.h.b16 %v212
    %v385 = vunpack.c.l.b16 %v213
    %v386 = vunpack.c.h.b16 %v213
    %v387 = vunpack.c.l.b16 %v214
    %v388 = vunpack.c.h.b16 %v214
    %v389 = vunpack.c.l.b16 %v215
    %v390 = vunpack.c.h.b16 %v215
    %v391 = vunpack.c.l.b16 %v216
    %v392 = vunpack.c.h.b16 %v216
    %v393 = vunpack.c.l.b16 %v217
    %v394 = vunpack.c.h.b16 %v217
    %v395 = vunpack.c.l.b16 %v218
    %v396 = vunpack.c.h.b16 %v218
    %v397 = vunpack.c.l.b16 %v219
    %v398 = vunpack.c.h.b16 %v219
    %v399 = vunpack.c.l.b16 %v220
    %v400 = vunpack.c.h.b16 %v220
    %v401 = vunpack.c.l.b16 %v221
    %v402 = vunpack.c.h.b16 %v221
    %v403 = vunpack.c.l.b16 %v222
    %v404 = vunpack.c.h.b16 %v222
    %v405 = vunpack.c.l.b16 %v223
    %v406 = vunpack.c.h.b16 %v223
    %v407 = vunpack.c.l.b16 %v224
    %v408 = vunpack.c.h.b16 %v224
    %v409 = vunpack.c.l.b16 %v225
    %v410 = vunpack.c.h.b16 %v225
    %v411 = vunpack.c.l.b16 %v226
    %v412 = vunpack.c.h.b16 %v226
    %v413 = vunpack.c.l.b16 %v227
    %v414 = vunpack.c.h.b16 %v227
    %v415 = vunpack.c.l.b16 %v228
    %v416 = vunpack.c.h.b16 %v228
    %v417 = vunpack.c.l.b16 %v229
    %v418 = vunpack.c.h.b16 %v229
    %v419 = vunpack.c.l.b16 %v230
    %v420 = vunpack.c.h.b16 %v230
    %v421 = vunpack.c.l.b16 %v231
    %v422 = vunpack.c.h.b16 %v231
    %v423 = vunpack.c.l.b16 %v232
    %v424 = vunpack.c.h.b16 %v232
    %v425 = vpack.c.b16 %v301, %v297
    %v426 = vpack.c.b16 %v302, %v298
    %v427 = vpack.c.b16 %v303, %v299
    %v428 = vpack.c.b16 %v304, %v300
    %v429 = vpack.c.b16 %v309, %v305
    %v430 = vpack.c.b16 %v310, %v306
    %v431 = vpack.c.b16 %v311, %v307
    %v432 = vpack.c.b16 %v312, %v308
    %v433 = vpack.c.b16 %v317, %v313
    %v434 = vpack.c.b16 %v318, %v314
    %v435 = vpack.c.b16 %v319, %v315
    %v436 = vpack.c.b16 %v320, %v316
    %v437 = vpack.c.b16 %v325, %v321
    %v438 = vpack.c.b16 %v326, %v322
    %v439 = vpack.c.b16 %v327, %v323
    %v440 = vpack.c.b16 %v328, %v324
    %v441 = vpack.c.b16 %v333, %v329
    %v442 = vpack.c.b16 %v334, %v330
    %v443 = vpack.c.b16 %v335, %v331
    %v444 = vpack.c.b16 %v336, %v332
    %v445 = vpack.c.b16 %v341, %v337
    %v446 = vpack.c.b16 %v342, %v338
    %v447 = vpack.c.b16 %v343, %v339
    %v448 = vpack.c.b16 %v344, %v340
    %v449 = vpack.c.b16 %v349, %v345
    %v450 = vpack.c.b16 %v350, %v346
    %v451 = vpack.c.b16 %v351, %v347
    %v452 = vpack.c.b16 %v352, %v348
    %v453 = vpack.c.b16 %v357, %v353
    %v454 = vpack.c.b16 %v358, %v354
    %v455 = vpack.c.b16 %v359, %v355
    %v456 = vpack.c.b16 %v360, %v356
    %v457 = vpack.c.b16 %v365, %v361
    %v458 = vpack.c.b16 %v366, %v362
    %v459 = vpack.c.b16 %v367, %v363
    %v460 = vpack.c.b16 %v368, %v364
    %v461 = vpack.c.b16 %v373, %v369
    %v462 = vpack.c.b16 %v374, %v370
    %v463 = vpack.c.b16 %v375, %v371
    %v464 = vpack.c.b16 %v376, %v372
    %v465 = vpack.c.b16 %v381, %v377
    %v466 = vpack.c.b16 %v382, %v378
    %v467 = vpack.c.b16 %v383, %v379
    %v468 = vpack.c.b16 %v384, %v380
    %v469 = vpack.c.b16 %v389, %v385
    %v470 = vpack.c.b16 %v390, %v386
    %v471 = vpack.c.b16 %v391, %v387
    %v472 = vpack.c.b16 %v392, %v388
    %v473 = vpack.c.b16 %v397, %v393
    %v474 = vpack.c.b16 %v398, %v394
    %v475 = vpack.c.b16 %v399, %v395
    %v476 = vpack.c.b16 %v400, %v396
    %v477 = vpack.c.b16 %v405, %v401
    %v478 = vpack.c.b16 %v406, %v402
    %v479 = vpack.c.b16 %v407, %v403
    %v480 = vpack.c.b16 %v408, %v404
    %v481 = vpack.c.b16 %v413, %v409
    %v482 = vpack.c.b16 %v414, %v410
    %v483 = vpack.c.b16 %v415, %v411
    %v484 = vpack.c.b16 %v416, %v412
    %v485 = vpack.c.b16 %v421, %v417
    %v486 = vpack.c.b16 %v422, %v418
    %v487 = vpack.c.b16 %v423, %v419
    %v488 = vpack.c.b16 %v424, %v420
    %553 = vmatprep.subr.bf16.mxu0 %v426
    %554 = vmatpush1.bf16.msra.mxu0 %v425
    %555 = vmatprep.subr.bf16.mxu0 %v430
    %556 = vmatpush1.bf16.msra.mxu0 %v429
    %557 = vmatprep.subr.bf16.mxu0 %v434
    %558 = vmatpush1.bf16.msra.mxu0 %v433
    %559 = vmatprep.subr.bf16.mxu0 %v438
    %560 = vmatpush1.bf16.msra.mxu0 %v437
    %561 = vmatprep.subr.bf16.mxu0 %v442
    %562 = vmatpush1.bf16.msra.mxu0 %v441
    %563 = vmatprep.subr.bf16.mxu0 %v446
    %564 = vmatpush1.bf16.msra.mxu0 %v445
    %565 = vmatprep.subr.bf16.mxu0 %v450
    %566 = vmatpush1.bf16.msra.mxu0 %v449
    %567 = vmatprep.subr.bf16.mxu0 %v454
    %568 = vmatpush1.bf16.msra.mxu0 %v453
    %569 = vmatprep.subr.bf16.mxu0 %v458
    %570 = vmatpush1.bf16.msra.mxu0 %v457
    %571 = vmatprep.subr.bf16.mxu0 %v462
    %572 = vmatpush1.bf16.msra.mxu0 %v461
    %573 = vmatprep.subr.bf16.mxu0 %v466
    %574 = vmatpush1.bf16.msra.mxu0 %v465
    %575 = vmatprep.subr.bf16.mxu0 %v470
    %576 = vmatpush1.bf16.msra.mxu0 %v469
    %577 = vmatprep.subr.bf16.mxu0 %v474
    %578 = vmatpush1.bf16.msra.mxu0 %v473
    %579 = vmatprep.subr.bf16.mxu0 %v478
    %580 = vmatpush1.bf16.msra.mxu0 %v477
    %581 = vmatprep.subr.bf16.mxu0 %v482
    %582 = vmatpush1.bf16.msra.mxu0 %v481
    %583 = vmatprep.subr.bf16.mxu0 %v486
    %584 = vmatpush1.bf16.msra.mxu0 %v485
    %585 = vmatprep.mubr.bf16.mxu0 %v104
    %586 = vmatmul.mubr.bf16.gmra.mrb[0].mxu0 %v103
    %v587 = vpop.f32.mrb[0].mxu0
    %v588 = vadd.f32 0.0, %v587
    %v589 = vpop.f32.mrb[0].mxu0
    %v590 = vadd.f32 0.0, %v589
    %v591 = vpop.f32.mrb[0].mxu0
    %v592 = vpop.f32.mrb[0].mxu0
    %593 = vdwg.mxu0
    %594 = vmatprep.subr.bf16.mxu0 %v428
    %595 = vmatpush1.bf16.msra.mxu0 %v427
    %596 = vmatprep.subr.bf16.mxu0 %v432
    %597 = vmatpush1.bf16.msra.mxu0 %v431
    %598 = vmatprep.subr.bf16.mxu0 %v436
    %599 = vmatpush1.bf16.msra.mxu0 %v435
    %600 = vmatprep.subr.bf16.mxu0 %v440
    %601 = vmatpush1.bf16.msra.mxu0 %v439
    %602 = vmatprep.subr.bf16.mxu0 %v444
    %603 = vmatpush1.bf16.msra.mxu0 %v443
    %604 = vmatprep.subr.bf16.mxu0 %v448
    %605 = vmatpush1.bf16.msra.mxu0 %v447
    %606 = vmatprep.subr.bf16.mxu0 %v452
    %607 = vmatpush1.bf16.msra.mxu0 %v451
    %608 = vmatprep.subr.bf16.mxu0 %v456
    %609 = vmatpush1.bf16.msra.mxu0 %v455
    %610 = vmatprep.subr.bf16.mxu0 %v460
    %611 = vmatpush1.bf16.msra.mxu0 %v459
    %612 = vmatprep.subr.bf16.mxu0 %v464
    %613 = vmatpush1.bf16.msra.mxu0 %v463
    %614 = vmatprep.subr.bf16.mxu0 %v468
    %615 = vmatpush1.bf16.msra.mxu0 %v467
    %616 = vmatprep.subr.bf16.mxu0 %v472
    %617 = vmatpush1.bf16.msra.mxu0 %v471
    %618 = vmatprep.subr.bf16.mxu0 %v476
    %619 = vmatpush1.bf16.msra.mxu0 %v475
    %620 = vmatprep.subr.bf16.mxu0 %v480
    %621 = vmatpush1.bf16.msra.mxu0 %v479
    %622 = vmatprep.subr.bf16.mxu0 %v484
    %623 = vmatpush1.bf16.msra.mxu0 %v483
    %624 = vmatprep.subr.bf16.mxu0 %v488
    %625 = vmatpush1.bf16.msra.mxu0 %v487
    %626 = vmatprep.mubr.bf16.mxu0 %v104
    %627 = vmatmul.mubr.bf16.gmra.mrb[0].mxu0 %v103
    %v628 = vpop.f32.mrb[0].mxu0
    %v629 = vadd.f32 0.0, %v628
    %v630 = vpop.f32.mrb[0].mxu0
    %v631 = vadd.f32 0.0, %v630
    %v632 = vpop.f32.mrb[0].mxu0
    %v633 = vpop.f32.mrb[0].mxu0
    %634 = vdwg.mxu0
    %v699 = vunpack.c.l.b16 %v105
    %v700 = vunpack.c.h.b16 %v105
    %v701 = vunpack.c.l.b16 %v106
    %v702 = vunpack.c.h.b16 %v106
    %v703 = vunpack.c.l.b16 %v107
    %v704 = vunpack.c.h.b16 %v107
    %v705 = vunpack.c.l.b16 %v108
    %v706 = vunpack.c.h.b16 %v108
    %v707 = vunpack.c.l.b16 %v109
    %v708 = vunpack.c.h.b16 %v109
    %v709 = vunpack.c.l.b16 %v110
    %v710 = vunpack.c.h.b16 %v110
    %v711 = vunpack.c.l.b16 %v111
    %v712 = vunpack.c.h.b16 %v111
    %v713 = vunpack.c.l.b16 %v112
    %v714 = vunpack.c.h.b16 %v112
    %v715 = vunpack.c.l.b16 %v113
    %v716 = vunpack.c.h.b16 %v113
    %v717 = vunpack.c.l.b16 %v114
    %v718 = vunpack.c.h.b16 %v114
    %v719 = vunpack.c.l.b16 %v115
    %v720 = vunpack.c.h.b16 %v115
    %v721 = vunpack.c.l.b16 %v116
    %v722 = vunpack.c.h.b16 %v116
    %v723 = vunpack.c.l.b16 %v117
    %v724 = vunpack.c.h.b16 %v117
    %v725 = vunpack.c.l.b16 %v118
    %v726 = vunpack.c.h.b16 %v118
    %v727 = vunpack.c.l.b16 %v119
    %v728 = vunpack.c.h.b16 %v119
    %v729 = vunpack.c.l.b16 %v120
    %v730 = vunpack.c.h.b16 %v120
    %v731 = vunpack.c.l.b16 %v121
    %v732 = vunpack.c.h.b16 %v121
    %v733 = vunpack.c.l.b16 %v122
    %v734 = vunpack.c.h.b16 %v122
    %v735 = vunpack.c.l.b16 %v123
    %v736 = vunpack.c.h.b16 %v123
    %v737 = vunpack.c.l.b16 %v124
    %v738 = vunpack.c.h.b16 %v124
    %v739 = vunpack.c.l.b16 %v125
    %v740 = vunpack.c.h.b16 %v125
    %v741 = vunpack.c.l.b16 %v126
    %v742 = vunpack.c.h.b16 %v126
    %v743 = vunpack.c.l.b16 %v127
    %v744 = vunpack.c.h.b16 %v127
    %v745 = vunpack.c.l.b16 %v128
    %v746 = vunpack.c.h.b16 %v128
    %v747 = vunpack.c.l.b16 %v129
    %v748 = vunpack.c.h.b16 %v129
    %v749 = vunpack.c.l.b16 %v130
    %v750 = vunpack.c.h.b16 %v130
    %v751 = vunpack.c.l.b16 %v131
    %v752 = vunpack.c.h.b16 %v131
    %v753 = vunpack.c.l.b16 %v132
    %v754 = vunpack.c.h.b16 %v132
    %v755 = vunpack.c.l.b16 %v133
    %v756 = vunpack.c.h.b16 %v133
    %v757 = vunpack.c.l.b16 %v134
    %v758 = vunpack.c.h.b16 %v134
    %v759 = vunpack.c.l.b16 %v135
    %v760 = vunpack.c.h.b16 %v135
    %v761 = vunpack.c.l.b16 %v136
    %v762 = vunpack.c.h.b16 %v136
    %v763 = vunpack.c.l.b16 %v137
    %v764 = vunpack.c.h.b16 %v137
    %v765 = vunpack.c.l.b16 %v138
    %v766 = vunpack.c.h.b16 %v138
    %v767 = vunpack.c.l.b16 %v139
    %v768 = vunpack.c.h.b16 %v139
    %v769 = vunpack.c.l.b16 %v140
    %v770 = vunpack.c.h.b16 %v140
    %v771 = vunpack.c.l.b16 %v141
    %v772 = vunpack.c.h.b16 %v141
    %v773 = vunpack.c.l.b16 %v142
    %v774 = vunpack.c.h.b16 %v142
    %v775 = vunpack.c.l.b16 %v143
    %v776 = vunpack.c.h.b16 %v143
    %v777 = vunpack.c.l.b16 %v144
    %v778 = vunpack.c.h.b16 %v144
    %v779 = vunpack.c.l.b16 %v145
    %v780 = vunpack.c.h.b16 %v145
    %v781 = vunpack.c.l.b16 %v146
    %v782 = vunpack.c.h.b16 %v146
    %v783 = vunpack.c.l.b16 %v147
    %v784 = vunpack.c.h.b16 %v147
    %v785 = vunpack.c.l.b16 %v148
    %v786 = vunpack.c.h.b16 %v148
    %v787 = vunpack.c.l.b16 %v149
    %v788 = vunpack.c.h.b16 %v149
    %v789 = vunpack.c.l.b16 %v150
    %v790 = vunpack.c.h.b16 %v150
    %v791 = vunpack.c.l.b16 %v151
    %v792 = vunpack.c.h.b16 %v151
    %v793 = vunpack.c.l.b16 %v152
    %v794 = vunpack.c.h.b16 %v152
    %v795 = vunpack.c.l.b16 %v153
    %v796 = vunpack.c.h.b16 %v153
    %v797 = vunpack.c.l.b16 %v154
    %v798 = vunpack.c.h.b16 %v154
    %v799 = vunpack.c.l.b16 %v155
    %v800 = vunpack.c.h.b16 %v155
    %v801 = vunpack.c.l.b16 %v156
    %v802 = vunpack.c.h.b16 %v156
    %v803 = vunpack.c.l.b16 %v157
    %v804 = vunpack.c.h.b16 %v157
    %v805 = vunpack.c.l.b16 %v158
    %v806 = vunpack.c.h.b16 %v158
    %v807 = vunpack.c.l.b16 %v159
    %v808 = vunpack.c.h.b16 %v159
    %v809 = vunpack.c.l.b16 %v160
    %v810 = vunpack.c.h.b16 %v160
    %v811 = vunpack.c.l.b16 %v161
    %v812 = vunpack.c.h.b16 %v161
    %v813 = vunpack.c.l.b16 %v162
    %v814 = vunpack.c.h.b16 %v162
    %v815 = vunpack.c.l.b16 %v163
    %v816 = vunpack.c.h.b16 %v163
    %v817 = vunpack.c.l.b16 %v164
    %v818 = vunpack.c.h.b16 %v164
    %v819 = vunpack.c.l.b16 %v165
    %v820 = vunpack.c.h.b16 %v165
    %v821 = vunpack.c.l.b16 %v166
    %v822 = vunpack.c.h.b16 %v166
    %v823 = vunpack.c.l.b16 %v167
    %v824 = vunpack.c.h.b16 %v167
    %v825 = vunpack.c.l.b16 %v168
    %v826 = vunpack.c.h.b16 %v168
    %v827 = vpack.c.b16 %v703, %v699
    %v828 = vpack.c.b16 %v704, %v700
    %v829 = vpack.c.b16 %v705, %v701
    %v830 = vpack.c.b16 %v706, %v702
    %v831 = vpack.c.b16 %v711, %v707
    %v832 = vpack.c.b16 %v712, %v708
    %v833 = vpack.c.b16 %v713, %v709
    %v834 = vpack.c.b16 %v714, %v710
    %v835 = vpack.c.b16 %v719, %v715
    %v836 = vpack.c.b16 %v720, %v716
    %v837 = vpack.c.b16 %v721, %v717
    %v838 = vpack.c.b16 %v722, %v718
    %v839 = vpack.c.b16 %v727, %v723
    %v840 = vpack.c.b16 %v728, %v724
    %v841 = vpack.c.b16 %v729, %v725
    %v842 = vpack.c.b16 %v730, %v726
    %v843 = vpack.c.b16 %v735, %v731
    %v844 = vpack.c.b16 %v736, %v732
    %v845 = vpack.c.b16 %v737, %v733
    %v846 = vpack.c.b16 %v738, %v734
    %v847 = vpack.c.b16 %v743, %v739
    %v848 = vpack.c.b16 %v744, %v740
    %v849 = vpack.c.b16 %v745, %v741
    %v850 = vpack.c.b16 %v746, %v742
    %v851 = vpack.c.b16 %v751, %v747
    %v852 = vpack.c.b16 %v752, %v748
    %v853 = vpack.c.b16 %v753, %v749
    %v854 = vpack.c.b16 %v754, %v750
    %v855 = vpack.c.b16 %v759, %v755
    %v856 = vpack.c.b16 %v760, %v756
    %v857 = vpack.c.b16 %v761, %v757
    %v858 = vpack.c.b16 %v762, %v758
    %v859 = vpack.c.b16 %v767, %v763
    %v860 = vpack.c.b16 %v768, %v764
    %v861 = vpack.c.b16 %v769, %v765
    %v862 = vpack.c.b16 %v770, %v766
    %v863 = vpack.c.b16 %v775, %v771
    %v864 = vpack.c.b16 %v776, %v772
    %v865 = vpack.c.b16 %v777, %v773
    %v866 = vpack.c.b16 %v778, %v774
    %v867 = vpack.c.b16 %v783, %v779
    %v868 = vpack.c.b16 %v784, %v780
    %v869 = vpack.c.b16 %v785, %v781
    %v870 = vpack.c.b16 %v786, %v782
    %v871 = vpack.c.b16 %v791, %v787
    %v872 = vpack.c.b16 %v792, %v788
    %v873 = vpack.c.b16 %v793, %v789
    %v874 = vpack.c.b16 %v794, %v790
    %v875 = vpack.c.b16 %v799, %v795
    %v876 = vpack.c.b16 %v800, %v796
    %v877 = vpack.c.b16 %v801, %v797
    %v878 = vpack.c.b16 %v802, %v798
    %v879 = vpack.c.b16 %v807, %v803
    %v880 = vpack.c.b16 %v808, %v804
    %v881 = vpack.c.b16 %v809, %v805
    %v882 = vpack.c.b16 %v810, %v806
    %v883 = vpack.c.b16 %v815, %v811
    %v884 = vpack.c.b16 %v816, %v812
    %v885 = vpack.c.b16 %v817, %v813
    %v886 = vpack.c.b16 %v818, %v814
    %v887 = vpack.c.b16 %v823, %v819
    %v888 = vpack.c.b16 %v824, %v820
    %v889 = vpack.c.b16 %v825, %v821
    %v890 = vpack.c.b16 %v826, %v822
    %955 = vmatprep.subr.bf16.mxu0 %v828
    %956 = vmatpush1.bf16.msra.mxu0 %v827
    %957 = vmatprep.subr.bf16.mxu0 %v832
    %958 = vmatpush1.bf16.msra.mxu0 %v831
    %959 = vmatprep.subr.bf16.mxu0 %v836
    %960 = vmatpush1.bf16.msra.mxu0 %v835
    %961 = vmatprep.subr.bf16.mxu0 %v840
    %962 = vmatpush1.bf16.msra.mxu0 %v839
    %963 = vmatprep.subr.bf16.mxu0 %v844
    %964 = vmatpush1.bf16.msra.mxu0 %v843
    %965 = vmatprep.subr.bf16.mxu0 %v848
    %966 = vmatpush1.bf16.msra.mxu0 %v847
    %967 = vmatprep.subr.bf16.mxu0 %v852
    %968 = vmatpush1.bf16.msra.mxu0 %v851
    %969 = vmatprep.subr.bf16.mxu0 %v856
    %970 = vmatpush1.bf16.msra.mxu0 %v855
    %971 = vmatprep.subr.bf16.mxu0 %v860
    %972 = vmatpush1.bf16.msra.mxu0 %v859
    %973 = vmatprep.subr.bf16.mxu0 %v864
    %974 = vmatpush1.bf16.msra.mxu0 %v863
    %975 = vmatprep.subr.bf16.mxu0 %v868
    %976 = vmatpush1.bf16.msra.mxu0 %v867
    %977 = vmatprep.subr.bf16.mxu0 %v872
    %978 = vmatpush1.bf16.msra.mxu0 %v871
    %979 = vmatprep.subr.bf16.mxu0 %v876
    %980 = vmatpush1.bf16.msra.mxu0 %v875
    %981 = vmatprep.subr.bf16.mxu0 %v880
    %982 = vmatpush1.bf16.msra.mxu0 %v879
    %983 = vmatprep.subr.bf16.mxu0 %v884
    %984 = vmatpush1.bf16.msra.mxu0 %v883
    %985 = vmatprep.subr.bf16.mxu0 %v888
    %986 = vmatpush1.bf16.msra.mxu0 %v887
    %987 = vmatprep.mubr.bf16.mxu0 %v100
    %988 = vmatmul.mubr.bf16.gmra.mrb[0].mxu0 %v99
    %v989 = vpop.f32.mrb[0].mxu0
    %v990 = vadd.f32 %v588, %v989
    %v991 = vpop.f32.mrb[0].mxu0
    %v992 = vadd.f32 %v590, %v991
    %v993 = vpop.f32.mrb[0].mxu0
    %v994 = vpop.f32.mrb[0].mxu0
    %995 = vdwg.mxu0
    %996 = vmatprep.subr.bf16.mxu0 %v830
    %997 = vmatpush1.bf16.msra.mxu0 %v829
    %998 = vmatprep.subr.bf16.mxu0 %v834
    %999 = vmatpush1.bf16.msra.mxu0 %v833
    %1000 = vmatprep.subr.bf16.mxu0 %v838
    %1001 = vmatpush1.bf16.msra.mxu0 %v837
    %1002 = vmatprep.subr.bf16.mxu0 %v842
    %1003 = vmatpush1.bf16.msra.mxu0 %v841
    %1004 = vmatprep.subr.bf16.mxu0 %v846
    %1005 = vmatpush1.bf16.msra.mxu0 %v845
    %1006 = vmatprep.subr.bf16.mxu0 %v850
    %1007 = vmatpush1.bf16.msra.mxu0 %v849
    %1008 = vmatprep.subr.bf16.mxu0 %v854
    %1009 = vmatpush1.bf16.msra.mxu0 %v853
    %1010 = vmatprep.subr.bf16.mxu0 %v858
    %1011 = vmatpush1.bf16.msra.mxu0 %v857
    %1012 = vmatprep.subr.bf16.mxu0 %v862
    %1013 = vmatpush1.bf16.msra.mxu0 %v861
    %1014 = vmatprep.subr.bf16.mxu0 %v866
    %1015 = vmatpush1.bf16.msra.mxu0 %v865
    %1016 = vmatprep.subr.bf16.mxu0 %v870
    %1017 = vmatpush1.bf16.msra.mxu0 %v869
    %1018 = vmatprep.subr.bf16.mxu0 %v874
    %1019 = vmatpush1.bf16.msra.mxu0 %v873
    %1020 = vmatprep.subr.bf16.mxu0 %v878
    %1021 = vmatpush1.bf16.msra.mxu0 %v877
    %1022 = vmatprep.subr.bf16.mxu0 %v882
    %1023 = vmatpush1.bf16.msra.mxu0 %v881
    %1024 = vmatprep.subr.bf16.mxu0 %v886
    %1025 = vmatpush1.bf16.msra.mxu0 %v885
    %1026 = vmatprep.subr.bf16.mxu0 %v890
    %1027 = vmatpush1.bf16.msra.mxu0 %v889
    %1028 = vmatprep.mubr.bf16.mxu0 %v100
    %1029 = vmatmul.mubr.bf16.gmra.mrb[0].mxu0 %v99
    %v1030 = vpop.f32.mrb[0].mxu0
    %v1031 = vadd.f32 %v629, %v1030
    %v1032 = vpop.f32.mrb[0].mxu0
    %v1033 = vadd.f32 %v631, %v1032
    %v1034 = vpop.f32.mrb[0].mxu0
    %v1035 = vpop.f32.mrb[0].mxu0
    %1036 = vdwg.mxu0
    %v1037 = vld [vmem:[%s4] sm:$0xf]
    %v1039 = vlaneseq
    %v1040 = vshrl.u32 %v1039, 7
    %v1041 = vsub.s32 0, %v1040
    %v1042 = vrot.slane %v1037, %v1041
    %v1043 = vlaneseq
    %v1044 = vshrl.u32 %v1043, 7
    %v1045 = vsub.s32 1, %v1044
    %v1046 = vrot.slane %v1037, %v1045
    %v1047 = vlaneseq
    %v1048 = vshrl.u32 %v1047, 7
    %v1049 = vsub.s32 2, %v1048
    %v1050 = vrot.slane %v1037, %v1049
    %v1051 = vlaneseq
    %v1052 = vshrl.u32 %v1051, 7
    %v1053 = vsub.s32 3, %v1052
    %v1054 = vrot.slane %v1037, %v1053
    %v1059 = vadd.f32 %v990, %v1042
    %v1060 = vadd.f32 %v992, %v1046
    %v1061 = vadd.f32 %v1031, %v1050
    %v1062 = vadd.f32 %v1033, %v1054
    %v1063 = vmax.f32 %v1059, 0.0
    %v1064 = vmax.f32 %v1060, 0.0
    %v1065 = vmax.f32 %v1061, 0.0
    %v1066 = vmax.f32 %v1062, 0.0
    %v1067 = vpack.c.bf16 %v1063, %v1063
    %v1068 = vpack.c.bf16 %v1064, %v1064
    %v1069 = vpack.c.bf16 %v1065, %v1065
    %v1070 = vpack.c.bf16 %v1066, %v1066
    %v1071 = vld [vmem:[#allocation10] sm:$0xff]
    %v1072 = vld [vmem:[#allocation10 + $0x8] sm:$0xff]
    %v1073 = vld [vmem:[#allocation10 + $0x10] sm:$0xff]
    %v1074 = vld [vmem:[#allocation10 + $0x18] sm:$0xff]
    %v1075 = vld [vmem:[#allocation10 + $0x20] sm:$0xff]
    %v1076 = vld [vmem:[#allocation10 + $0x28] sm:$0xff]
    %v1077 = vld [vmem:[#allocation10 + $0x30] sm:$0xff]
    %v1078 = vld [vmem:[#allocation10 + $0x38] sm:$0xff]
    %v1079 = vld [vmem:[#allocation10 + $0x40] sm:$0xff]
    %v1080 = vld [vmem:[#allocation10 + $0x48] sm:$0xff]
    %v1081 = vld [vmem:[#allocation10 + $0x50] sm:$0xff]
    %v1082 = vld [vmem:[#allocation10 + $0x58] sm:$0xff]
    %v1083 = vld [vmem:[#allocation10 + $0x60] sm:$0xff]
    %v1084 = vld [vmem:[#allocation10 + $0x68] sm:$0xff]
    %v1085 = vld [vmem:[#allocation10 + $0x70] sm:$0xff]
    %v1086 = vld [vmem:[#allocation10 + $0x78] sm:$0xff]
    %v1087 = vld [vmem:[#allocation10 + $0x80] sm:$0xff]
    %v1088 = vld [vmem:[#allocation10 + $0x88] sm:$0xff]
    %v1089 = vld [vmem:[#allocation10 + $0x90] sm:$0xff]
    %v1090 = vld [vmem:[#allocation10 + $0x98] sm:$0xff]
    %v1091 = vld [vmem:[#allocation10 + $0xa0] sm:$0xff]
    %v1092 = vld [vmem:[#allocation10 + $0xa8] sm:$0xff]
    %v1093 = vld [vmem:[#allocation10 + $0xb0] sm:$0xff]
    %v1094 = vld [vmem:[#allocation10 + $0xb8] sm:$0xff]
    %v1095 = vld [vmem:[#allocation10 + $0xc0] sm:$0xff]
    %v1096 = vld [vmem:[#allocation10 + $0xc8] sm:$0xff]
    %v1097 = vld [vmem:[#allocation10 + $0xd0] sm:$0xff]
    %v1098 = vld [vmem:[#allocation10 + $0xd8] sm:$0xff]
    %v1099 = vld [vmem:[#allocation10 + $0xe0] sm:$0xff]
    %v1100 = vld [vmem:[#allocation10 + $0xe8] sm:$0xff]
    %v1101 = vld [vmem:[#allocation10 + $0xf0] sm:$0xff]
    %v1102 = vld [vmem:[#allocation10 + $0xf8] sm:$0xff]
    %v1103 = vld [vmem:[#allocation10 + $0x100] sm:$0xff]
    %v1104 = vld [vmem:[#allocation10 + $0x108] sm:$0xff]
    %v1105 = vld [vmem:[#allocation10 + $0x110] sm:$0xff]
    %v1106 = vld [vmem:[#allocation10 + $0x118] sm:$0xff]
    %v1107 = vld [vmem:[#allocation10 + $0x120] sm:$0xff]
    %v1108 = vld [vmem:[#allocation10 + $0x128] sm:$0xff]
    %v1109 = vld [vmem:[#allocation10 + $0x130] sm:$0xff]
    %v1110 = vld [vmem:[#allocation10 + $0x138] sm:$0xff]
    %v1111 = vld [vmem:[#allocation10 + $0x140] sm:$0xff]
    %v1112 = vld [vmem:[#allocation10 + $0x148] sm:$0xff]
    %v1113 = vld [vmem:[#allocation10 + $0x150] sm:$0xff]
    %v1114 = vld [vmem:[#allocation10 + $0x158] sm:$0xff]
    %v1115 = vld [vmem:[#allocation10 + $0x160] sm:$0xff]
    %v1116 = vld [vmem:[#allocation10 + $0x168] sm:$0xff]
    %v1117 = vld [vmem:[#allocation10 + $0x170] sm:$0xff]
    %v1118 = vld [vmem:[#allocation10 + $0x178] sm:$0xff]
    %v1119 = vld [vmem:[#allocation10 + $0x180] sm:$0xff]
    %v1120 = vld [vmem:[#allocation10 + $0x188] sm:$0xff]
    %v1121 = vld [vmem:[#allocation10 + $0x190] sm:$0xff]
    %v1122 = vld [vmem:[#allocation10 + $0x198] sm:$0xff]
    %v1123 = vld [vmem:[#allocation10 + $0x1a0] sm:$0xff]
    %v1124 = vld [vmem:[#allocation10 + $0x1a8] sm:$0xff]
    %v1125 = vld [vmem:[#allocation10 + $0x1b0] sm:$0xff]
    %v1126 = vld [vmem:[#allocation10 + $0x1b8] sm:$0xff]
    %v1127 = vld [vmem:[#allocation10 + $0x1c0] sm:$0xff]
    %v1128 = vld [vmem:[#allocation10 + $0x1c8] sm:$0xff]
    %v1129 = vld [vmem:[#allocation10 + $0x1d0] sm:$0xff]
    %v1130 = vld [vmem:[#allocation10 + $0x1d8] sm:$0xff]
    %v1131 = vld [vmem:[#allocation10 + $0x1e0] sm:$0xff]
    %v1132 = vld [vmem:[#allocation10 + $0x1e8] sm:$0xff]
    %v1133 = vld [vmem:[#allocation10 + $0x1f0] sm:$0xff]
    %v1134 = vld [vmem:[#allocation10 + $0x1f8] sm:$0xff]
    %v1135 = vld [vmem:[#allocation10 + $0x200] sm:$0xff]
    %v1136 = vld [vmem:[#allocation10 + $0x208] sm:$0xff]
    %v1137 = vld [vmem:[#allocation10 + $0x210] sm:$0xff]
    %v1138 = vld [vmem:[#allocation10 + $0x218] sm:$0xff]
    %v1139 = vld [vmem:[#allocation10 + $0x220] sm:$0xff]
    %v1140 = vld [vmem:[#allocation10 + $0x228] sm:$0xff]
    %v1141 = vld [vmem:[#allocation10 + $0x230] sm:$0xff]
    %v1142 = vld [vmem:[#allocation10 + $0x238] sm:$0xff]
    %v1143 = vld [vmem:[#allocation10 + $0x240] sm:$0xff]
    %v1144 = vld [vmem:[#allocation10 + $0x248] sm:$0xff]
    %v1145 = vld [vmem:[#allocation10 + $0x250] sm:$0xff]
    %v1146 = vld [vmem:[#allocation10 + $0x258] sm:$0xff]
    %v1147 = vld [vmem:[#allocation10 + $0x260] sm:$0xff]
    %v1148 = vld [vmem:[#allocation10 + $0x268] sm:$0xff]
    %v1149 = vld [vmem:[#allocation10 + $0x270] sm:$0xff]
    %v1150 = vld [vmem:[#allocation10 + $0x278] sm:$0xff]
    %v1151 = vld [vmem:[#allocation10 + $0x280] sm:$0xff]
    %v1152 = vld [vmem:[#allocation10 + $0x288] sm:$0xff]
    %v1153 = vld [vmem:[#allocation10 + $0x290] sm:$0xff]
    %v1154 = vld [vmem:[#allocation10 + $0x298] sm:$0xff]
    %v1155 = vld [vmem:[#allocation10 + $0x2a0] sm:$0xff]
    %v1156 = vld [vmem:[#allocation10 + $0x2a8] sm:$0xff]
    %v1157 = vld [vmem:[#allocation10 + $0x2b0] sm:$0xff]
    %v1158 = vld [vmem:[#allocation10 + $0x2b8] sm:$0xff]
    %v1159 = vld [vmem:[#allocation10 + $0x2c0] sm:$0xff]
    %v1160 = vld [vmem:[#allocation10 + $0x2c8] sm:$0xff]
    %v1161 = vld [vmem:[#allocation10 + $0x2d0] sm:$0xff]
    %v1162 = vld [vmem:[#allocation10 + $0x2d8] sm:$0xff]
    %v1163 = vld [vmem:[#allocation10 + $0x2e0] sm:$0xff]
    %v1164 = vld [vmem:[#allocation10 + $0x2e8] sm:$0xff]
    %v1165 = vld [vmem:[#allocation10 + $0x2f0] sm:$0xff]
    %v1166 = vld [vmem:[#allocation10 + $0x2f8] sm:$0xff]
    %v1167 = vld [vmem:[#allocation10 + $0x300] sm:$0xff]
    %v1168 = vld [vmem:[#allocation10 + $0x308] sm:$0xff]
    %v1169 = vld [vmem:[#allocation10 + $0x310] sm:$0xff]
    %v1170 = vld [vmem:[#allocation10 + $0x318] sm:$0xff]
    %v1171 = vld [vmem:[#allocation10 + $0x320] sm:$0xff]
    %v1172 = vld [vmem:[#allocation10 + $0x328] sm:$0xff]
    %v1173 = vld [vmem:[#allocation10 + $0x330] sm:$0xff]
    %v1174 = vld [vmem:[#allocation10 + $0x338] sm:$0xff]
    %v1175 = vld [vmem:[#allocation10 + $0x340] sm:$0xff]
    %v1176 = vld [vmem:[#allocation10 + $0x348] sm:$0xff]
    %v1177 = vld [vmem:[#allocation10 + $0x350] sm:$0xff]
    %v1178 = vld [vmem:[#allocation10 + $0x358] sm:$0xff]
    %v1179 = vld [vmem:[#allocation10 + $0x360] sm:$0xff]
    %v1180 = vld [vmem:[#allocation10 + $0x368] sm:$0xff]
    %v1181 = vld [vmem:[#allocation10 + $0x370] sm:$0xff]
    %v1182 = vld [vmem:[#allocation10 + $0x378] sm:$0xff]
    %v1183 = vld [vmem:[#allocation10 + $0x380] sm:$0xff]
    %v1184 = vld [vmem:[#allocation10 + $0x388] sm:$0xff]
    %v1185 = vld [vmem:[#allocation10 + $0x390] sm:$0xff]
    %v1186 = vld [vmem:[#allocation10 + $0x398] sm:$0xff]
    %v1187 = vld [vmem:[#allocation10 + $0x3a0] sm:$0xff]
    %v1188 = vld [vmem:[#allocation10 + $0x3a8] sm:$0xff]
    %v1189 = vld [vmem:[#allocation10 + $0x3b0] sm:$0xff]
    %v1190 = vld [vmem:[#allocation10 + $0x3b8] sm:$0xff]
    %v1191 = vld [vmem:[#allocation10 + $0x3c0] sm:$0xff]
    %v1192 = vld [vmem:[#allocation10 + $0x3c8] sm:$0xff]
    %v1193 = vld [vmem:[#allocation10 + $0x3d0] sm:$0xff]
    %v1194 = vld [vmem:[#allocation10 + $0x3d8] sm:$0xff]
    %v1195 = vld [vmem:[#allocation10 + $0x3e0] sm:$0xff]
    %v1196 = vld [vmem:[#allocation10 + $0x3e8] sm:$0xff]
    %v1197 = vld [vmem:[#allocation10 + $0x3f0] sm:$0xff]
    %v1198 = vld [vmem:[#allocation10 + $0x3f8] sm:$0xff]
    %v1199 = vld [vmem:[%s6] sm:$0xf]
    %v1201 = vlaneseq
    %v1202 = vshrl.u32 %v1201, 7
    %v1203 = vsub.s32 0, %v1202
    %v1204 = vrot.slane %v1199, %v1203
    %v1205 = vlaneseq
    %v1206 = vshrl.u32 %v1205, 7
    %v1207 = vsub.s32 1, %v1206
    %v1208 = vrot.slane %v1199, %v1207
    %v1209 = vlaneseq
    %v1210 = vshrl.u32 %v1209, 7
    %v1211 = vsub.s32 2, %v1210
    %v1212 = vrot.slane %v1199, %v1211
    %v1213 = vlaneseq
    %v1214 = vshrl.u32 %v1213, 7
    %v1215 = vsub.s32 3, %v1214
    %v1216 = vrot.slane %v1199, %v1215
    %v1349 = vunpack.c.l.b16 %v1071
    %v1350 = vunpack.c.h.b16 %v1071
    %v1351 = vunpack.c.l.b16 %v1072
    %v1352 = vunpack.c.h.b16 %v1072
    %v1353 = vunpack.c.l.b16 %v1073
    %v1354 = vunpack.c.h.b16 %v1073
    %v1355 = vunpack.c.l.b16 %v1074
    %v1356 = vunpack.c.h.b16 %v1074
    %v1357 = vunpack.c.l.b16 %v1075
    %v1358 = vunpack.c.h.b16 %v1075
    %v1359 = vunpack.c.l.b16 %v1076
    %v1360 = vunpack.c.h.b16 %v1076
    %v1361 = vunpack.c.l.b16 %v1077
    %v1362 = vunpack.c.h.b16 %v1077
    %v1363 = vunpack.c.l.b16 %v1078
    %v1364 = vunpack.c.h.b16 %v1078
    %v1365 = vunpack.c.l.b16 %v1079
    %v1366 = vunpack.c.h.b16 %v1079
    %v1367 = vunpack.c.l.b16 %v1080
    %v1368 = vunpack.c.h.b16 %v1080
    %v1369 = vunpack.c.l.b16 %v1081
    %v1370 = vunpack.c.h.b16 %v1081
    %v1371 = vunpack.c.l.b16 %v1082
    %v1372 = vunpack.c.h.b16 %v1082
    %v1373 = vunpack.c.l.b16 %v1083
    %v1374 = vunpack.c.h.b16 %v1083
    %v1375 = vunpack.c.l.b16 %v1084
    %v1376 = vunpack.c.h.b16 %v1084
    %v1377 = vunpack.c.l.b16 %v1085
    %v1378 = vunpack.c.h.b16 %v1085
    %v1379 = vunpack.c.l.b16 %v1086
    %v1380 = vunpack.c.h.b16 %v1086
    %v1381 = vunpack.c.l.b16 %v1087
    %v1382 = vunpack.c.h.b16 %v1087
    %v1383 = vunpack.c.l.b16 %v1088
    %v1384 = vunpack.c.h.b16 %v1088
    %v1385 = vunpack.c.l.b16 %v1089
    %v1386 = vunpack.c.h.b16 %v1089
    %v1387 = vunpack.c.l.b16 %v1090
    %v1388 = vunpack.c.h.b16 %v1090
    %v1389 = vunpack.c.l.b16 %v1091
    %v1390 = vunpack.c.h.b16 %v1091
    %v1391 = vunpack.c.l.b16 %v1092
    %v1392 = vunpack.c.h.b16 %v1092
    %v1393 = vunpack.c.l.b16 %v1093
    %v1394 = vunpack.c.h.b16 %v1093
    %v1395 = vunpack.c.l.b16 %v1094
    %v1396 = vunpack.c.h.b16 %v1094
    %v1397 = vunpack.c.l.b16 %v1095
    %v1398 = vunpack.c.h.b16 %v1095
    %v1399 = vunpack.c.l.b16 %v1096
    %v1400 = vunpack.c.h.b16 %v1096
    %v1401 = vunpack.c.l.b16 %v1097
    %v1402 = vunpack.c.h.b16 %v1097
    %v1403 = vunpack.c.l.b16 %v1098
    %v1404 = vunpack.c.h.b16 %v1098
    %v1405 = vunpack.c.l.b16 %v1099
    %v1406 = vunpack.c.h.b16 %v1099
    %v1407 = vunpack.c.l.b16 %v1100
    %v1408 = vunpack.c.h.b16 %v1100
    %v1409 = vunpack.c.l.b16 %v1101
    %v1410 = vunpack.c.h.b16 %v1101
    %v1411 = vunpack.c.l.b16 %v1102
    %v1412 = vunpack.c.h.b16 %v1102
    %v1413 = vunpack.c.l.b16 %v1103
    %v1414 = vunpack.c.h.b16 %v1103
    %v1415 = vunpack.c.l.b16 %v1104
    %v1416 = vunpack.c.h.b16 %v1104
    %v1417 = vunpack.c.l.b16 %v1105
    %v1418 = vunpack.c.h.b16 %v1105
    %v1419 = vunpack.c.l.b16 %v1106
    %v1420 = vunpack.c.h.b16 %v1106
    %v1421 = vunpack.c.l.b16 %v1107
    %v1422 = vunpack.c.h.b16 %v1107
    %v1423 = vunpack.c.l.b16 %v1108
    %v1424 = vunpack.c.h.b16 %v1108
    %v1425 = vunpack.c.l.b16 %v1109
    %v1426 = vunpack.c.h.b16 %v1109
    %v1427 = vunpack.c.l.b16 %v1110
    %v1428 = vunpack.c.h.b16 %v1110
    %v1429 = vunpack.c.l.b16 %v1111
    %v1430 = vunpack.c.h.b16 %v1111
    %v1431 = vunpack.c.l.b16 %v1112
    %v1432 = vunpack.c.h.b16 %v1112
    %v1433 = vunpack.c.l.b16 %v1113
    %v1434 = vunpack.c.h.b16 %v1113
    %v1435 = vunpack.c.l.b16 %v1114
    %v1436 = vunpack.c.h.b16 %v1114
    %v1437 = vunpack.c.l.b16 %v1115
    %v1438 = vunpack.c.h.b16 %v1115
    %v1439 = vunpack.c.l.b16 %v1116
    %v1440 = vunpack.c.h.b16 %v1116
    %v1441 = vunpack.c.l.b16 %v1117
    %v1442 = vunpack.c.h.b16 %v1117
    %v1443 = vunpack.c.l.b16 %v1118
    %v1444 = vunpack.c.h.b16 %v1118
    %v1445 = vunpack.c.l.b16 %v1119
    %v1446 = vunpack.c.h.b16 %v1119
    %v1447 = vunpack.c.l.b16 %v1120
    %v1448 = vunpack.c.h.b16 %v1120
    %v1449 = vunpack.c.l.b16 %v1121
    %v1450 = vunpack.c.h.b16 %v1121
    %v1451 = vunpack.c.l.b16 %v1122
    %v1452 = vunpack.c.h.b16 %v1122
    %v1453 = vunpack.c.l.b16 %v1123
    %v1454 = vunpack.c.h.b16 %v1123
    %v1455 = vunpack.c.l.b16 %v1124
    %v1456 = vunpack.c.h.b16 %v1124
    %v1457 = vunpack.c.l.b16 %v1125
    %v1458 = vunpack.c.h.b16 %v1125
    %v1459 = vunpack.c.l.b16 %v1126
    %v1460 = vunpack.c.h.b16 %v1126
    %v1461 = vunpack.c.l.b16 %v1127
    %v1462 = vunpack.c.h.b16 %v1127
    %v1463 = vunpack.c.l.b16 %v1128
    %v1464 = vunpack.c.h.b16 %v1128
    %v1465 = vunpack.c.l.b16 %v1129
    %v1466 = vunpack.c.h.b16 %v1129
    %v1467 = vunpack.c.l.b16 %v1130
    %v1468 = vunpack.c.h.b16 %v1130
    %v1469 = vunpack.c.l.b16 %v1131
    %v1470 = vunpack.c.h.b16 %v1131
    %v1471 = vunpack.c.l.b16 %v1132
    %v1472 = vunpack.c.h.b16 %v1132
    %v1473 = vunpack.c.l.b16 %v1133
    %v1474 = vunpack.c.h.b16 %v1133
    %v1475 = vunpack.c.l.b16 %v1134
    %v1476 = vunpack.c.h.b16 %v1134
    %v1477 = vunpack.c.l.b16 %v1135
    %v1478 = vunpack.c.h.b16 %v1135
    %v1479 = vunpack.c.l.b16 %v1136
    %v1480 = vunpack.c.h.b16 %v1136
    %v1481 = vunpack.c.l.b16 %v1137
    %v1482 = vunpack.c.h.b16 %v1137
    %v1483 = vunpack.c.l.b16 %v1138
    %v1484 = vunpack.c.h.b16 %v1138
    %v1485 = vunpack.c.l.b16 %v1139
    %v1486 = vunpack.c.h.b16 %v1139
    %v1487 = vunpack.c.l.b16 %v1140
    %v1488 = vunpack.c.h.b16 %v1140
    %v1489 = vunpack.c.l.b16 %v1141
    %v1490 = vunpack.c.h.b16 %v1141
    %v1491 = vunpack.c.l.b16 %v1142
    %v1492 = vunpack.c.h.b16 %v1142
    %v1493 = vunpack.c.l.b16 %v1143
    %v1494 = vunpack.c.h.b16 %v1143
    %v1495 = vunpack.c.l.b16 %v1144
    %v1496 = vunpack.c.h.b16 %v1144
    %v1497 = vunpack.c.l.b16 %v1145
    %v1498 = vunpack.c.h.b16 %v1145
    %v1499 = vunpack.c.l.b16 %v1146
    %v1500 = vunpack.c.h.b16 %v1146
    %v1501 = vunpack.c.l.b16 %v1147
    %v1502 = vunpack.c.h.b16 %v1147
    %v1503 = vunpack.c.l.b16 %v1148
    %v1504 = vunpack.c.h.b16 %v1148
    %v1505 = vunpack.c.l.b16 %v1149
    %v1506 = vunpack.c.h.b16 %v1149
    %v1507 = vunpack.c.l.b16 %v1150
    %v1508 = vunpack.c.h.b16 %v1150
    %v1509 = vunpack.c.l.b16 %v1151
    %v1510 = vunpack.c.h.b16 %v1151
    %v1511 = vunpack.c.l.b16 %v1152
    %v1512 = vunpack.c.h.b16 %v1152
    %v1513 = vunpack.c.l.b16 %v1153
    %v1514 = vunpack.c.h.b16 %v1153
    %v1515 = vunpack.c.l.b16 %v1154
    %v1516 = vunpack.c.h.b16 %v1154
    %v1517 = vunpack.c.l.b16 %v1155
    %v1518 = vunpack.c.h.b16 %v1155
    %v1519 = vunpack.c.l.b16 %v1156
    %v1520 = vunpack.c.h.b16 %v1156
    %v1521 = vunpack.c.l.b16 %v1157
    %v1522 = vunpack.c.h.b16 %v1157
    %v1523 = vunpack.c.l.b16 %v1158
    %v1524 = vunpack.c.h.b16 %v1158
    %v1525 = vunpack.c.l.b16 %v1159
    %v1526 = vunpack.c.h.b16 %v1159
    %v1527 = vunpack.c.l.b16 %v1160
    %v1528 = vunpack.c.h.b16 %v1160
    %v1529 = vunpack.c.l.b16 %v1161
    %v1530 = vunpack.c.h.b16 %v1161
    %v1531 = vunpack.c.l.b16 %v1162
    %v1532 = vunpack.c.h.b16 %v1162
    %v1533 = vunpack.c.l.b16 %v1163
    %v1534 = vunpack.c.h.b16 %v1163
    %v1535 = vunpack.c.l.b16 %v1164
    %v1536 = vunpack.c.h.b16 %v1164
    %v1537 = vunpack.c.l.b16 %v1165
    %v1538 = vunpack.c.h.b16 %v1165
    %v1539 = vunpack.c.l.b16 %v1166
    %v1540 = vunpack.c.h.b16 %v1166
    %v1541 = vunpack.c.l.b16 %v1167
    %v1542 = vunpack.c.h.b16 %v1167
    %v1543 = vunpack.c.l.b16 %v1168
    %v1544 = vunpack.c.h.b16 %v1168
    %v1545 = vunpack.c.l.b16 %v1169
    %v1546 = vunpack.c.h.b16 %v1169
    %v1547 = vunpack.c.l.b16 %v1170
    %v1548 = vunpack.c.h.b16 %v1170
    %v1549 = vunpack.c.l.b16 %v1171
    %v1550 = vunpack.c.h.b16 %v1171
    %v1551 = vunpack.c.l.b16 %v1172
    %v1552 = vunpack.c.h.b16 %v1172
    %v1553 = vunpack.c.l.b16 %v1173
    %v1554 = vunpack.c.h.b16 %v1173
    %v1555 = vunpack.c.l.b16 %v1174
    %v1556 = vunpack.c.h.b16 %v1174
    %v1557 = vunpack.c.l.b16 %v1175
    %v1558 = vunpack.c.h.b16 %v1175
    %v1559 = vunpack.c.l.b16 %v1176
    %v1560 = vunpack.c.h.b16 %v1176
    %v1561 = vunpack.c.l.b16 %v1177
    %v1562 = vunpack.c.h.b16 %v1177
    %v1563 = vunpack.c.l.b16 %v1178
    %v1564 = vunpack.c.h.b16 %v1178
    %v1565 = vunpack.c.l.b16 %v1179
    %v1566 = vunpack.c.h.b16 %v1179
    %v1567 = vunpack.c.l.b16 %v1180
    %v1568 = vunpack.c.h.b16 %v1180
    %v1569 = vunpack.c.l.b16 %v1181
    %v1570 = vunpack.c.h.b16 %v1181
    %v1571 = vunpack.c.l.b16 %v1182
    %v1572 = vunpack.c.h.b16 %v1182
    %v1573 = vunpack.c.l.b16 %v1183
    %v1574 = vunpack.c.h.b16 %v1183
    %v1575 = vunpack.c.l.b16 %v1184
    %v1576 = vunpack.c.h.b16 %v1184
    %v1577 = vunpack.c.l.b16 %v1185
    %v1578 = vunpack.c.h.b16 %v1185
    %v1579 = vunpack.c.l.b16 %v1186
    %v1580 = vunpack.c.h.b16 %v1186
    %v1581 = vunpack.c.l.b16 %v1187
    %v1582 = vunpack.c.h.b16 %v1187
    %v1583 = vunpack.c.l.b16 %v1188
    %v1584 = vunpack.c.h.b16 %v1188
    %v1585 = vunpack.c.l.b16 %v1189
    %v1586 = vunpack.c.h.b16 %v1189
    %v1587 = vunpack.c.l.b16 %v1190
    %v1588 = vunpack.c.h.b16 %v1190
    %v1589 = vunpack.c.l.b16 %v1191
    %v1590 = vunpack.c.h.b16 %v1191
    %v1591 = vunpack.c.l.b16 %v1192
    %v1592 = vunpack.c.h.b16 %v1192
    %v1593 = vunpack.c.l.b16 %v1193
    %v1594 = vunpack.c.h.b16 %v1193
    %v1595 = vunpack.c.l.b16 %v1194
    %v1596 = vunpack.c.h.b16 %v1194
    %v1597 = vunpack.c.l.b16 %v1195
    %v1598 = vunpack.c.h.b16 %v1195
    %v1599 = vunpack.c.l.b16 %v1196
    %v1600 = vunpack.c.h.b16 %v1196
    %v1601 = vunpack.c.l.b16 %v1197
    %v1602 = vunpack.c.h.b16 %v1197
    %v1603 = vunpack.c.l.b16 %v1198
    %v1604 = vunpack.c.h.b16 %v1198
    %v1605 = vpack.c.b16 %v1353, %v1349
    %v1606 = vpack.c.b16 %v1354, %v1350
    %v1607 = vpack.c.b16 %v1355, %v1351
    %v1608 = vpack.c.b16 %v1356, %v1352
    %v1609 = vpack.c.b16 %v1361, %v1357
    %v1610 = vpack.c.b16 %v1362, %v1358
    %v1611 = vpack.c.b16 %v1363, %v1359
    %v1612 = vpack.c.b16 %v1364, %v1360
    %v1613 = vpack.c.b16 %v1369, %v1365
    %v1614 = vpack.c.b16 %v1370, %v1366
    %v1615 = vpack.c.b16 %v1371, %v1367
    %v1616 = vpack.c.b16 %v1372, %v1368
    %v1617 = vpack.c.b16 %v1377, %v1373
    %v1618 = vpack.c.b16 %v1378, %v1374
    %v1619 = vpack.c.b16 %v1379, %v1375
    %v1620 = vpack.c.b16 %v1380, %v1376
    %v1621 = vpack.c.b16 %v1385, %v1381
    %v1622 = vpack.c.b16 %v1386, %v1382
    %v1623 = vpack.c.b16 %v1387, %v1383
    %v1624 = vpack.c.b16 %v1388, %v1384
    %v1625 = vpack.c.b16 %v1393, %v1389
    %v1626 = vpack.c.b16 %v1394, %v1390
    %v1627 = vpack.c.b16 %v1395, %v1391
    %v1628 = vpack.c.b16 %v1396, %v1392
    %v1629 = vpack.c.b16 %v1401, %v1397
    %v1630 = vpack.c.b16 %v1402, %v1398
    %v1631 = vpack.c.b16 %v1403, %v1399
    %v1632 = vpack.c.b16 %v1404, %v1400
    %v1633 = vpack.c.b16 %v1409, %v1405
    %v1634 = vpack.c.b16 %v1410, %v1406
    %v1635 = vpack.c.b16 %v1411, %v1407
    %v1636 = vpack.c.b16 %v1412, %v1408
    %v1637 = vpack.c.b16 %v1417, %v1413
    %v1638 = vpack.c.b16 %v1418, %v1414
    %v1639 = vpack.c.b16 %v1419, %v1415
    %v1640 = vpack.c.b16 %v1420, %v1416
    %v1641 = vpack.c.b16 %v1425, %v1421
    %v1642 = vpack.c.b16 %v1426, %v1422
    %v1643 = vpack.c.b16 %v1427, %v1423
    %v1644 = vpack.c.b16 %v1428, %v1424
    %v1645 = vpack.c.b16 %v1433, %v1429
    %v1646 = vpack.c.b16 %v1434, %v1430
    %v1647 = vpack.c.b16 %v1435, %v1431
    %v1648 = vpack.c.b16 %v1436, %v1432
    %v1649 = vpack.c.b16 %v1441, %v1437
    %v1650 = vpack.c.b16 %v1442, %v1438
    %v1651 = vpack.c.b16 %v1443, %v1439
    %v1652 = vpack.c.b16 %v1444, %v1440
    %v1653 = vpack.c.b16 %v1449, %v1445
    %v1654 = vpack.c.b16 %v1450, %v1446
    %v1655 = vpack.c.b16 %v1451, %v1447
    %v1656 = vpack.c.b16 %v1452, %v1448
    %v1657 = vpack.c.b16 %v1457, %v1453
    %v1658 = vpack.c.b16 %v1458, %v1454
    %v1659 = vpack.c.b16 %v1459, %v1455
    %v1660 = vpack.c.b16 %v1460, %v1456
    %v1661 = vpack.c.b16 %v1465, %v1461
    %v1662 = vpack.c.b16 %v1466, %v1462
    %v1663 = vpack.c.b16 %v1467, %v1463
    %v1664 = vpack.c.b16 %v1468, %v1464
    %v1665 = vpack.c.b16 %v1473, %v1469
    %v1666 = vpack.c.b16 %v1474, %v1470
    %v1667 = vpack.c.b16 %v1475, %v1471
    %v1668 = vpack.c.b16 %v1476, %v1472
    %v1669 = vpack.c.b16 %v1481, %v1477
    %v1670 = vpack.c.b16 %v1482, %v1478
    %v1671 = vpack.c.b16 %v1483, %v1479
    %v1672 = vpack.c.b16 %v1484, %v1480
    %v1673 = vpack.c.b16 %v1489, %v1485
    %v1674 = vpack.c.b16 %v1490, %v1486
    %v1675 = vpack.c.b16 %v1491, %v1487
    %v1676 = vpack.c.b16 %v1492, %v1488
    %v1677 = vpack.c.b16 %v1497, %v1493
    %v1678 = vpack.c.b16 %v1498, %v1494
    %v1679 = vpack.c.b16 %v1499, %v1495
    %v1680 = vpack.c.b16 %v1500, %v1496
    %v1681 = vpack.c.b16 %v1505, %v1501
    %v1682 = vpack.c.b16 %v1506, %v1502
    %v1683 = vpack.c.b16 %v1507, %v1503
    %v1684 = vpack.c.b16 %v1508, %v1504
    %v1685 = vpack.c.b16 %v1513, %v1509
    %v1686 = vpack.c.b16 %v1514, %v1510
    %v1687 = vpack.c.b16 %v1515, %v1511
    %v1688 = vpack.c.b16 %v1516, %v1512
    %v1689 = vpack.c.b16 %v1521, %v1517
    %v1690 = vpack.c.b16 %v1522, %v1518
    %v1691 = vpack.c.b16 %v1523, %v1519
    %v1692 = vpack.c.b16 %v1524, %v1520
    %v1693 = vpack.c.b16 %v1529, %v1525
    %v1694 = vpack.c.b16 %v1530, %v1526
    %v1695 = vpack.c.b16 %v1531, %v1527
    %v1696 = vpack.c.b16 %v1532, %v1528
    %v1697 = vpack.c.b16 %v1537, %v1533
    %v1698 = vpack.c.b16 %v1538, %v1534
    %v1699 = vpack.c.b16 %v1539, %v1535
    %v1700 = vpack.c.b16 %v1540, %v1536
    %v1701 = vpack.c.b16 %v1545, %v1541
    %v1702 = vpack.c.b16 %v1546, %v1542
    %v1703 = vpack.c.b16 %v1547, %v1543
    %v1704 = vpack.c.b16 %v1548, %v1544
    %v1705 = vpack.c.b16 %v1553, %v1549
    %v1706 = vpack.c.b16 %v1554, %v1550
    %v1707 = vpack.c.b16 %v1555, %v1551
    %v1708 = vpack.c.b16 %v1556, %v1552
    %v1709 = vpack.c.b16 %v1561, %v1557
    %v1710 = vpack.c.b16 %v1562, %v1558
    %v1711 = vpack.c.b16 %v1563, %v1559
    %v1712 = vpack.c.b16 %v1564, %v1560
    %v1713 = vpack.c.b16 %v1569, %v1565
    %v1714 = vpack.c.b16 %v1570, %v1566
    %v1715 = vpack.c.b16 %v1571, %v1567
    %v1716 = vpack.c.b16 %v1572, %v1568
    %v1717 = vpack.c.b16 %v1577, %v1573
    %v1718 = vpack.c.b16 %v1578, %v1574
    %v1719 = vpack.c.b16 %v1579, %v1575
    %v1720 = vpack.c.b16 %v1580, %v1576
    %v1721 = vpack.c.b16 %v1585, %v1581
    %v1722 = vpack.c.b16 %v1586, %v1582
    %v1723 = vpack.c.b16 %v1587, %v1583
    %v1724 = vpack.c.b16 %v1588, %v1584
    %v1725 = vpack.c.b16 %v1593, %v1589
    %v1726 = vpack.c.b16 %v1594, %v1590
    %v1727 = vpack.c.b16 %v1595, %v1591
    %v1728 = vpack.c.b16 %v1596, %v1592
    %v1729 = vpack.c.b16 %v1601, %v1597
    %v1730 = vpack.c.b16 %v1602, %v1598
    %v1731 = vpack.c.b16 %v1603, %v1599
    %v1732 = vpack.c.b16 %v1604, %v1600
    %1861 = vmatprep.subr.bf16.mxu0 %v1606
    %1862 = vmatpush1.bf16.msra.mxu0 %v1605
    %1863 = vmatprep.subr.bf16.mxu0 %v1610
    %1864 = vmatpush1.bf16.msra.mxu0 %v1609
    %1865 = vmatprep.subr.bf16.mxu0 %v1614
    %1866 = vmatpush1.bf16.msra.mxu0 %v1613
    %1867 = vmatprep.subr.bf16.mxu0 %v1618
    %1868 = vmatpush1.bf16.msra.mxu0 %v1617
    %1869 = vmatprep.subr.bf16.mxu0 %v1622
    %1870 = vmatpush1.bf16.msra.mxu0 %v1621
    %1871 = vmatprep.subr.bf16.mxu0 %v1626
    %1872 = vmatpush1.bf16.msra.mxu0 %v1625
    %1873 = vmatprep.subr.bf16.mxu0 %v1630
    %1874 = vmatpush1.bf16.msra.mxu0 %v1629
    %1875 = vmatprep.subr.bf16.mxu0 %v1634
    %1876 = vmatpush1.bf16.msra.mxu0 %v1633
    %1877 = vmatprep.subr.bf16.mxu0 %v1638
    %1878 = vmatpush1.bf16.msra.mxu0 %v1637
    %1879 = vmatprep.subr.bf16.mxu0 %v1642
    %1880 = vmatpush1.bf16.msra.mxu0 %v1641
    %1881 = vmatprep.subr.bf16.mxu0 %v1646
    %1882 = vmatpush1.bf16.msra.mxu0 %v1645
    %1883 = vmatprep.subr.bf16.mxu0 %v1650
    %1884 = vmatpush1.bf16.msra.mxu0 %v1649
    %1885 = vmatprep.subr.bf16.mxu0 %v1654
    %1886 = vmatpush1.bf16.msra.mxu0 %v1653
    %1887 = vmatprep.subr.bf16.mxu0 %v1658
    %1888 = vmatpush1.bf16.msra.mxu0 %v1657
    %1889 = vmatprep.subr.bf16.mxu0 %v1662
    %1890 = vmatpush1.bf16.msra.mxu0 %v1661
    %1891 = vmatprep.subr.bf16.mxu0 %v1666
    %1892 = vmatpush1.bf16.msra.mxu0 %v1665
    %1893 = vmatprep.mubr.bf16.mxu0 %v1068
    %1894 = vmatmul.mubr.bf16.gmra.mrb[0].mxu0 %v1067
    %v1895 = vpop.f32.mrb[0].mxu0
    %v1896 = vadd.f32 %v1204, %v1895
    %v1897 = vpop.f32.mrb[0].mxu0
    %v1898 = vadd.f32 %v1208, %v1897
    %v1899 = vpop.f32.mrb[0].mxu0
    %v1900 = vpop.f32.mrb[0].mxu0
    %1901 = vdwg.mxu0
    %1902 = vmatprep.subr.bf16.mxu0 %v1670
    %1903 = vmatpush1.bf16.msra.mxu0 %v1669
    %1904 = vmatprep.subr.bf16.mxu0 %v1674
    %1905 = vmatpush1.bf16.msra.mxu0 %v1673
    %1906 = vmatprep.subr.bf16.mxu0 %v1678
    %1907 = vmatpush1.bf16.msra.mxu0 %v1677
    %1908 = vmatprep.subr.bf16.mxu0 %v1682
    %1909 = vmatpush1.bf16.msra.mxu0 %v1681
    %1910 = vmatprep.subr.bf16.mxu0 %v1686
    %1911 = vmatpush1.bf16.msra.mxu0 %v1685
    %1912 = vmatprep.subr.bf16.mxu0 %v1690
    %1913 = vmatpush1.bf16.msra.mxu0 %v1689
    %1914 = vmatprep.subr.bf16.mxu0 %v1694
    %1915 = vmatpush1.bf16.msra.mxu0 %v1693
    %1916 = vmatprep.subr.bf16.mxu0 %v1698
    %1917 = vmatpush1.bf16.msra.mxu0 %v1697
    %1918 = vmatprep.subr.bf16.mxu0 %v1702
    %1919 = vmatpush1.bf16.msra.mxu0 %v1701
    %1920 = vmatprep.subr.bf16.mxu0 %v1706
    %1921 = vmatpush1.bf16.msra.mxu0 %v1705
    %1922 = vmatprep.subr.bf16.mxu0 %v1710
    %1923 = vmatpush1.bf16.msra.mxu0 %v1709
    %1924 = vmatprep.subr.bf16.mxu0 %v1714
    %1925 = vmatpush1.bf16.msra.mxu0 %v1713
    %1926 = vmatprep.subr.bf16.mxu0 %v1718
    %1927 = vmatpush1.bf16.msra.mxu0 %v1717
    %1928 = vmatprep.subr.bf16.mxu0 %v1722
    %1929 = vmatpush1.bf16.msra.mxu0 %v1721
    %1930 = vmatprep.subr.bf16.mxu0 %v1726
    %1931 = vmatpush1.bf16.msra.mxu0 %v1725
    %1932 = vmatprep.subr.bf16.mxu0 %v1730
    %1933 = vmatpush1.bf16.msra.mxu0 %v1729
    %1934 = vmatprep.mubr.bf16.mxu0 %v1070
    %1935 = vmatmul.mubr.bf16.gmra.mrb[0].mxu0 %v1069
    %v1936 = vpop.f32.mrb[0].mxu0
    %v1937 = vadd.f32 %v1896, %v1936
    %v1938 = vpop.f32.mrb[0].mxu0
    %v1939 = vadd.f32 %v1898, %v1938
    %v1940 = vpop.f32.mrb[0].mxu0
    %v1941 = vpop.f32.mrb[0].mxu0
    %1942 = vdwg.mxu0
    %1943 = vmatprep.subr.bf16.mxu0 %v1608
    %1944 = vmatpush1.bf16.msra.mxu0 %v1607
    %1945 = vmatprep.subr.bf16.mxu0 %v1612
    %1946 = vmatpush1.bf16.msra.mxu0 %v1611
    %1947 = vmatprep.subr.bf16.mxu0 %v1616
    %1948 = vmatpush1.bf16.msra.mxu0 %v1615
    %1949 = vmatprep.subr.bf16.mxu0 %v1620
    %1950 = vmatpush1.bf16.msra.mxu0 %v1619
    %1951 = vmatprep.subr.bf16.mxu0 %v1624
    %1952 = vmatpush1.bf16.msra.mxu0 %v1623
    %1953 = vmatprep.subr.bf16.mxu0 %v1628
    %1954 = vmatpush1.bf16.msra.mxu0 %v1627
    %1955 = vmatprep.subr.bf16.mxu0 %v1632
    %1956 = vmatpush1.bf16.msra.mxu0 %v1631
    %1957 = vmatprep.subr.bf16.mxu0 %v1636
    %1958 = vmatpush1.bf16.msra.mxu0 %v1635
    %1959 = vmatprep.subr.bf16.mxu0 %v1640
    %1960 = vmatpush1.bf16.msra.mxu0 %v1639
    %1961 = vmatprep.subr.bf16.mxu0 %v1644
    %1962 = vmatpush1.bf16.msra.mxu0 %v1643
    %1963 = vmatprep.subr.bf16.mxu0 %v1648
    %1964 = vmatpush1.bf16.msra.mxu0 %v1647
    %1965 = vmatprep.subr.bf16.mxu0 %v1652
    %1966 = vmatpush1.bf16.msra.mxu0 %v1651
    %1967 = vmatprep.subr.bf16.mxu0 %v1656
    %1968 = vmatpush1.bf16.msra.mxu0 %v1655
    %1969 = vmatprep.subr.bf16.mxu0 %v1660
    %1970 = vmatpush1.bf16.msra.mxu0 %v1659
    %1971 = vmatprep.subr.bf16.mxu0 %v1664
    %1972 = vmatpush1.bf16.msra.mxu0 %v1663
    %1973 = vmatprep.subr.bf16.mxu0 %v1668
    %1974 = vmatpush1.bf16.msra.mxu0 %v1667
    %1975 = vmatprep.mubr.bf16.mxu0 %v1068
    %1976 = vmatmul.mubr.bf16.gmra.mrb[0].mxu0 %v1067
    %v1977 = vpop.f32.mrb[0].mxu0
    %v1978 = vadd.f32 %v1212, %v1977
    %v1979 = vpop.f32.mrb[0].mxu0
    %v1980 = vadd.f32 %v1216, %v1979
    %v1981 = vpop.f32.mrb[0].mxu0
    %v1982 = vpop.f32.mrb[0].mxu0
    %1983 = vdwg.mxu0
    %1984 = vmatprep.subr.bf16.mxu0 %v1672
    %1985 = vmatpush1.bf16.msra.mxu0 %v1671
    %1986 = vmatprep.subr.bf16.mxu0 %v1676
    %1987 = vmatpush1.bf16.msra.mxu0 %v1675
    %1988 = vmatprep.subr.bf16.mxu0 %v1680
    %1989 = vmatpush1.bf16.msra.mxu0 %v1679
    %1990 = vmatprep.subr.bf16.mxu0 %v1684
    %1991 = vmatpush1.bf16.msra.mxu0 %v1683
    %1992 = vmatprep.subr.bf16.mxu0 %v1688
    %1993 = vmatpush1.bf16.msra.mxu0 %v1687
    %1994 = vmatprep.subr.bf16.mxu0 %v1692
    %1995 = vmatpush1.bf16.msra.mxu0 %v1691
    %1996 = vmatprep.subr.bf16.mxu0 %v1696
    %1997 = vmatpush1.bf16.msra.mxu0 %v1695
    %1998 = vmatprep.subr.bf16.mxu0 %v1700
    %1999 = vmatpush1.bf16.msra.mxu0 %v1699
    %2000 = vmatprep.subr.bf16.mxu0 %v1704
    %2001 = vmatpush1.bf16.msra.mxu0 %v1703
    %2002 = vmatprep.subr.bf16.mxu0 %v1708
    %2003 = vmatpush1.bf16.msra.mxu0 %v1707
    %2004 = vmatprep.subr.bf16.mxu0 %v1712
    %2005 = vmatpush1.bf16.msra.mxu0 %v1711
    %2006 = vmatprep.subr.bf16.mxu0 %v1716
    %2007 = vmatpush1.bf16.msra.mxu0 %v1715
    %2008 = vmatprep.subr.bf16.mxu0 %v1720
    %2009 = vmatpush1.bf16.msra.mxu0 %v1719
    %2010 = vmatprep.subr.bf16.mxu0 %v1724
    %2011 = vmatpush1.bf16.msra.mxu0 %v1723
    %2012 = vmatprep.subr.bf16.mxu0 %v1728
    %2013 = vmatpush1.bf16.msra.mxu0 %v1727
    %2014 = vmatprep.subr.bf16.mxu0 %v1732
    %2015 = vmatpush1.bf16.msra.mxu0 %v1731
    %2016 = vmatprep.mubr.bf16.mxu0 %v1070
    %2017 = vmatmul.mubr.bf16.gmra.mrb[0].mxu0 %v1069
    %v2018 = vpop.f32.mrb[0].mxu0
    %v2019 = vadd.f32 %v1978, %v2018
    %v2020 = vpop.f32.mrb[0].mxu0
    %v2021 = vadd.f32 %v1980, %v2020
    %v2022 = vpop.f32.mrb[0].mxu0
    %v2023 = vpop.f32.mrb[0].mxu0
    %2024 = vdwg.mxu0
    %v2025 = vmax.f32 %v1937, 0.0
    %v2026 = vmax.f32 %v1939, 0.0
    %v2027 = vmax.f32 %v2019, 0.0
    %v2028 = vmax.f32 %v2021, 0.0
    %v2029 = vld [vmem:[%s7] sm:$0xf]
    %v2031 = vlaneseq
    %v2032 = vshrl.u32 %v2031, 7
    %v2033 = vsub.s32 0, %v2032
    %v2034 = vrot.slane %v2029, %v2033
    %v2035 = vlaneseq
    %v2036 = vshrl.u32 %v2035, 7
    %v2037 = vsub.s32 1, %v2036
    %v2038 = vrot.slane %v2029, %v2037
    %v2039 = vlaneseq
    %v2040 = vshrl.u32 %v2039, 7
    %v2041 = vsub.s32 2, %v2040
    %v2042 = vrot.slane %v2029, %v2041
    %v2043 = vlaneseq
    %v2044 = vshrl.u32 %v2043, 7
    %v2045 = vsub.s32 3, %v2044
    %v2046 = vrot.slane %v2029, %v2045
    %v2051 = vmul.f32 %v2025, %v2034
    %v2052 = vmul.f32 %v2026, %v2038
    %v2053 = vmul.f32 %v2027, %v2042
    %v2054 = vmul.f32 %v2028, %v2046
    %v2055 = vadd.f32 %v2051, %v2052
    %v2056 = vadd.f32 %v2055, %v2053
    %v2057 = vadd.f32 %v2056, %v2054
    %2058 = vadd.xlane.f32.xlu0 %v2057
    %v2059 = vpop.xlane.xlu0 %2058
    %v2060 = vld [vmem:[%s8] sm:$0x1]
    %v2062 = vlaneseq
    %v2063 = vshrl.u32 %v2062, 7
    %v2064 = vsub.s32 0, %v2063
    %v2065 = vrot.slane %v2060, %v2064
    %v2067 = vadd.f32 %v2059, %v2065
    %2068 = vst [vmem:[#allocation11] sm:$0xff] %v2067
    // Predicated region
    $region58: #{tpu_custom_call.1} parent=1 // pred_check
      _
    $region59: #{tpu_custom_call.1} parent=1 // pred_check_branch
      %2070 = sbr.rel (0) target = $region61
    $region60: #{tpu_custom_call.1} parent=1 // pred_region
      %s2072 = ssub.s32 128, 128
      %2073 = vsyncadd [#allocation4], %s2072
      %s2075 = sshll.u32 [#allocation11], 4
      %s2076 = int_to_ptr.vmem [resolvable:$true] %s2075
      %2078 = dma.vmem_to_hbm [thread:$0]  %s2076, 128, %s9, [#allocation4]
    $region61: #{tpu_custom_call.1} parent=1 // pred_fallthru
      _
    // Predicated region
    $region62: #{tpu_custom_call.1} parent=1 // pred_check
      _
    $region63: #{tpu_custom_call.1} parent=1 // pred_check_branch
      %2080 = sbr.rel (0) target = $region65
    $region64: #{tpu_custom_call.1} parent=1 // pred_region
      %2081 = dma.done [#allocation4], 128
    $region65: #{tpu_custom_call.1} parent=1 // pred_fallthru
      _
    %2082 = vsyncpa [#allocation3], 1
    %2083 = vsyncpa [#allocation6], 1
    %2084 = vsyncpa [#allocation9], 1
    %2085 = vsyncpa [#allocation4], 1

</llo_original>
